<compile_context>
chip_gen: v7x
topology: tpu7x:2x2x1
jax: 0.10.0
libtpu: 0.0.40
codegen_flags: <defaults>
</compile_context>

<pallas_src>
import functools

import numpy as np
import jax
import jax.numpy as jnp
from jax import lax
from jax.experimental import pallas as pl
from jax.experimental.pallas import tpu as pltpu


def _round_up(x, m):
    return (x + m - 1) // m * m


def _pick_row_tile(h, wo, kp, itemsize, budget=4 * 1024 * 1024):
    """Largest even divisor of h whose 4-parity im2col scratch fits `budget`."""
    for rh in range(h, 1, -2):
        if h % rh:
            continue
        if 4 * kp * (rh // 2) * wo * itemsize <= budget:
            return rh
    return 2


# ----------------------------------------------------------------------------
# Fused Conv3x3(padding=1) + bias + ReLU + MaxPool2d(2) kernel
# ----------------------------------------------------------------------------
def _conv_relu_pool_kernel(x_ref, w_ref, b_ref, o_ref, im_ref, *,
                           cin_p, rho, wo):
    """One (batch, row-tile) grid step.

    x_ref : (1, 1, 4, 2, cin_p, (rho+1)*wo)  column-shift views x row-parity
    w_ref : (Cout, 9*cin_p)                  compute_dtype
    b_ref : (Cout, 1)                        f32
    o_ref : (1, 1, Cout, rho*wo)             pooled output rows for this tile
    im_ref: (4, 9*cin_p, rho*wo)             im2col per output-parity combo
    """
    lanes = rho * wo

    # Assemble the 4 parity im2col matrices (one per (row, col) parity of the
    # conv output).  Every sublane block is cin_p (multiple of 16) tall; the
    # lane offset is 0 or wo (static).
    for pr in range(2):
        for pc in range(2):
            s = 2 * pr + pc
            for dy in range(3):
                for dx in range(3):
                    k0 = (dy * 3 + dx) * cin_p
                    hp = (pr + dy) % 2        # row-parity half of the slab
                    r0 = (pr + dy) // 2       # row offset inside that half
                    im_ref[s, k0:k0 + cin_p, :] = x_ref[
                        0, 0, pc + dx, hp, :, pl.ds(r0 * wo, lanes)]

    w = w_ref[...]                            # (Cout, K), bf16 straight to MXU

    # 4 big matmuls (Cout, K) @ (K, rho*wo); elementwise max == 2x2 max-pool.
    y = jnp.dot(w, im_ref[0], preferred_element_type=jnp.float32)
    for s in range(1, 4):
        y = jnp.maximum(
            y, jnp.dot(w, im_ref[s], preferred_element_type=jnp.float32))

    # Pool-then-bias+ReLU is exact (monotonic); f32 VPU epilogue.
    y = jnp.maximum(y + b_ref[...], 0.0)
    o_ref[0, 0] = y.astype(o_ref.dtype)


def conv3x3_relu_maxpool(x_nchw, w_oihw, bias, *, compute_dtype=jnp.bfloat16):
    """Conv2d(3x3, padding=1) + ReLU + MaxPool2d(2) fused in one Pallas kernel."""
    n, cin, h, w = x_nchw.shape
    cout = w_oihw.shape[0]
    assert h % 2 == 0 and w % 2 == 0, "even H/W expected (MaxPool2d(2))"
    wo = w // 2
    cin_p = _round_up(cin, 16)      # aligned sublane blocks in the bf16 scratch
    kp = 9 * cin_p
    itemsize = jnp.dtype(compute_dtype).itemsize
    rh = _pick_row_tile(h, wo, kp, itemsize)   # conv rows per grid step
    t = h // rh
    rho = rh // 2                               # pooled rows per grid step
    lane_in = (rho + 1) * wo
    lane_out = rho * wo

    # ---- layout glue (XLA, ~2x the small conv input): zero pad, 4 column
    # shift views (stride-2 columns), halo'd row slabs, row-parity split,
    # (row, col) flattened into one lane-dense trailing axis. ----
    xp = jnp.pad(x_nchw, ((0, 0), (0, cin_p - cin), (1, 1), (1, 1)))
    cols = jnp.stack([xp[:, :, :, m:m + 2 * wo:2] for m in range(4)], axis=1)
    # (n, 4, cin_p, h+2, wo)
    slabs = jnp.stack(
        [cols[:, :, :, j * rh:j * rh + rh + 2, :] for j in range(t)], axis=1)
    # (n, t, 4, cin_p, rh+2, wo)
    halves = jnp.stack([slabs[..., 0::2, :], slabs[..., 1::2, :]], axis=3)
    # (n, t, 4, 2, cin_p, rho+1, wo)
    xs = halves.reshape(n, t, 4, 2, cin_p, lane_in).astype(compute_dtype)

    wmat = jnp.pad(w_oihw, ((0, 0), (0, cin_p - cin), (0, 0), (0, 0)))
    wmat = jnp.transpose(wmat, (0, 2, 3, 1)).reshape(cout, kp).astype(compute_dtype)
    bcol = bias.reshape(cout, 1).astype(jnp.float32)

    out = pl.pallas_call(
        functools.partial(_conv_relu_pool_kernel, cin_p=cin_p, rho=rho, wo=wo),
        out_shape=jax.ShapeDtypeStruct((n, t, cout, lane_out), compute_dtype),
        grid=(n, t),
        in_specs=[
            pl.BlockSpec((1, 1, 4, 2, cin_p, lane_in),
                         lambda i, j: (i, j, 0, 0, 0, 0)),
            pl.BlockSpec((cout, kp), lambda i, j: (0, 0)),
            pl.BlockSpec((cout, 1), lambda i, j: (0, 0)),
        ],
        out_specs=pl.BlockSpec((1, 1, cout, lane_out),
                               lambda i, j: (i, j, 0, 0)),
        scratch_shapes=[pltpu.VMEM((4, kp, lane_out), compute_dtype)],
        compiler_params=pltpu.CompilerParams(
            dimension_semantics=("parallel", "parallel"),
            vmem_limit_bytes=32 * 1024 * 1024),
    )(xs, wmat, bcol)

    # (n, t, cout, rho*wo) -> NCHW (n, cout, h/2, w/2) for the next stage.
    out = out.reshape(n, t, cout, rho, wo)
    return jnp.transpose(out, (0, 2, 1, 3, 4)).reshape(n, cout, h // 2, w // 2)


# ----------------------------------------------------------------------------
# Classifier: Flatten -> Linear(F, 64) -> ReLU -> Linear(64, 2), K-tiled on F
# ----------------------------------------------------------------------------
def _mlp_kernel(x_ref, w1_ref, b1_ref, w2_ref, b2_ref, o_ref, acc_ref):
    @pl.when(pl.program_id(0) == 0)
    def _init():
        acc_ref[...] = jnp.zeros_like(acc_ref)

    acc_ref[...] += jnp.dot(x_ref[...], w1_ref[...],
                            preferred_element_type=jnp.float32)

    @pl.when(pl.program_id(0) == pl.num_programs(0) - 1)
    def _finalize():
        hidden = jnp.maximum(acc_ref[...] + b1_ref[...], 0.0)
        logits = jnp.dot(hidden.astype(w2_ref.dtype), w2_ref[...],
                         preferred_element_type=jnp.float32) + b2_ref[...]
        o_ref[...] = logits.astype(o_ref.dtype)


def _pick_k_tile(f):
    for cand in (8192, 4096, 2048, 1024, 512, 256, 128):
        if f % cand == 0:
            return cand
    return f


def mlp(x, w1, b1, w2, b2, *, compute_dtype=jnp.bfloat16):
    n, f = x.shape
    h1 = w1.shape[1]
    o = w2.shape[1]
    tk = _pick_k_tile(f)
    kt = f // tk
    return pl.pallas_call(
        _mlp_kernel,
        out_shape=jax.ShapeDtypeStruct((n, o), jnp.float32),
        grid=(kt,),
        in_specs=[
            pl.BlockSpec((n, tk), lambda k: (0, k)),
            pl.BlockSpec((tk, h1), lambda k: (k, 0)),
            pl.BlockSpec((1, h1), lambda k: (0, 0)),
            pl.BlockSpec((h1, o), lambda k: (0, 0)),
            pl.BlockSpec((1, o), lambda k: (0, 0)),
        ],
        out_specs=pl.BlockSpec((n, o), lambda k: (0, 0)),
        scratch_shapes=[pltpu.VMEM((n, h1), jnp.float32)],
        compiler_params=pltpu.CompilerParams(
            dimension_semantics=("arbitrary",),
            vmem_limit_bytes=32 * 1024 * 1024),
    )(x.astype(compute_dtype), w1.astype(compute_dtype),
      b1.reshape(1, -1).astype(jnp.float32),
      w2.astype(compute_dtype), b2.reshape(1, -1).astype(jnp.float32))


# ----------------------------------------------------------------------------
# Full forward (input NCHW, like PyTorch)
# ----------------------------------------------------------------------------
def simple_cnn_forward(x_nchw, params, *, compute_dtype=jnp.bfloat16):
    y = conv3x3_relu_maxpool(x_nchw, params["w1"], params["b1"],
                             compute_dtype=compute_dtype)
    y = conv3x3_relu_maxpool(y, params["w2"], params["b2"],
                             compute_dtype=compute_dtype)
    flat = y.reshape(y.shape[0], -1)      # NCHW flatten == torch.nn.Flatten
    return mlp(flat, params["wf1"], params["bf1"], params["wf2"], params["bf2"],
               compute_dtype=compute_dtype)


# ----------------------------------------------------------------------------
# Pure-JAX reference for correctness checking
# ----------------------------------------------------------------------------
def reference_forward(x_nchw, params):
    dn = ("NCHW", "OIHW", "NCHW")
    y = lax.conv_general_dilated(x_nchw, params["w1"], (1, 1), "SAME",
                                 dimension_numbers=dn)
    y = jnp.maximum(y + params["b1"][None, :, None, None], 0.0)
    y = lax.reduce_window(y, -jnp.inf, lax.max, (1, 1, 2, 2), (1, 1, 2, 2), "VALID")
    y = lax.conv_general_dilated(y, params["w2"], (1, 1), "SAME",
                                 dimension_numbers=dn)
    y = jnp.maximum(y + params["b2"][None, :, None, None], 0.0)
    y = lax.reduce_window(y, -jnp.inf, lax.max, (1, 1, 2, 2), (1, 1, 2, 2), "VALID")
    flat = y.reshape(y.shape[0], -1)
    h = jnp.maximum(flat @ params["wf1"] + params["bf1"], 0.0)
    return h @ params["wf2"] + params["bf2"]


# ----------------------------------------------------------------------------
if __name__ == "__main__":
    image_size = 16     # small, shape-consistent stand-in for the module's 128
    batch = 2
    feat = 32 * (image_size // 4) * (image_size // 4)

    key = jax.random.PRNGKey(0)
    kx, k1, k2, k3, k4, k5, k6, k7, k8 = jax.random.split(key, 9)

    def uinit(k, shape, fan_in):
        bound = 1.0 / float(np.sqrt(fan_in))
        return jax.random.uniform(k, shape, jnp.float32, -bound, bound)

    params = {
        "w1": uinit(k1, (16, 3, 3, 3), 3 * 9),      # OIHW, like PyTorch
        "b1": uinit(k2, (16,), 3 * 9),
        "w2": uinit(k3, (32, 16, 3, 3), 16 * 9),    # OIHW
        "b2": uinit(k4, (32,), 16 * 9),
        "wf1": uinit(k5, (feat, 64), feat),
        "bf1": uinit(k6, (64,), feat),
        "wf2": uinit(k7, (64, 2), 64),
        "bf2": uinit(k8, (2,), 64),
    }

    x = jax.random.normal(kx, (batch, 3, image_size, image_size), jnp.float32)

    ref = jax.block_until_ready(reference_forward(x, params))

    # Exact-path check (f32 streaming).
    out_f32 = jax.block_until_ready(
        simple_cnn_forward(x, params, compute_dtype=jnp.float32))
    # Perf-path check (bf16 streaming / bf16 MXU, f32 accumulation + epilogue).
    out_bf16 = jax.block_until_ready(
        simple_cnn_forward(x, params, compute_dtype=jnp.bfloat16))

    assert out_f32.shape == (batch, 2) and out_bf16.shape == (batch, 2)
    np.testing.assert_allclose(np.asarray(out_f32), np.asarray(ref),
                               rtol=1e-4, atol=1e-4)
    np.testing.assert_allclose(np.asarray(out_bf16), np.asarray(ref),
                               rtol=2e-2, atol=2e-2)
    print("KERNEL_OK")
</pallas_src>

<mosaic_0001>
module attributes {stable_mosaic.version = 11 : i64} {
  func.func @_conv_relu_pool_kernel(%arg0: i32, %arg1: i32, %arg2: memref<1x1x4x2x16x72xf32, #tpu.memory_space<vmem>>, %arg3: memref<16x144xf32, #tpu.memory_space<vmem>>, %arg4: memref<16x1xf32, #tpu.memory_space<vmem>>, %arg5: memref<1x1x16x64xf32, #tpu.memory_space<vmem>>, %arg6: memref<4x144x64xf32, #tpu.memory_space<vmem>>) attributes {dimension_semantics = [#tpu.dimension_semantics<parallel>, #tpu.dimension_semantics<parallel>], iteration_bounds = array<i64: 2, 1>, scalar_prefetch = 0 : i64, scratch_operands = 1 : i64, tpu.core_type = #tpu.core_type<tc>, window_params = [{transform_indices = @transform_0, window_bounds = array<i64: 1, 1, 4, 2, 16, 72>}, {pipeline_mode = #tpu.pipeline_mode<synchronous>, transform_indices = @transform_1, window_bounds = array<i64: 16, 144>}, {pipeline_mode = #tpu.pipeline_mode<synchronous>, transform_indices = @transform_2, window_bounds = array<i64: 16, 1>}, {transform_indices = @transform_3, window_bounds = array<i64: 1, 1, 16, 64>}]} {
    %c0 = arith.constant 0 : index
    %c0_0 = arith.constant 0 : index
    %c0_1 = arith.constant 0 : index
    %c0_2 = arith.constant 0 : index
    %c0_3 = arith.constant 0 : index
    %c0_4 = arith.constant 0 : index
    %0 = vector.load %arg2[%c0, %c0_0, %c0_1, %c0_2, %c0_3, %c0_4] : memref<1x1x4x2x16x72xf32, #tpu.memory_space<vmem>>, vector<1x1x1x1x16x64xf32>
    %1 = vector.shape_cast %0 : vector<1x1x1x1x16x64xf32> to vector<16x64xf32>
    %c0_5 = arith.constant 0 : index
    %c0_6 = arith.constant 0 : index
    %c0_7 = arith.constant 0 : index
    %2 = vector.load %arg6[%c0_5, %c0_6, %c0_7] : memref<4x144x64xf32, #tpu.memory_space<vmem>>, vector<1x16x64xf32>
    %3 = vector.shape_cast %2 : vector<1x16x64xf32> to vector<16x64xf32>
    %4 = vector.shape_cast %1 : vector<16x64xf32> to vector<1x16x64xf32>
    tpu.vector_store %arg6[%c0_5, %c0_6, %c0_7], %4 {strides = array<i32>} : memref<4x144x64xf32, #tpu.memory_space<vmem>>, vector<1x16x64xf32>,
    %c0_8 = arith.constant 0 : index
    %c0_9 = arith.constant 0 : index
    %c1 = arith.constant 1 : index
    %c0_10 = arith.constant 0 : index
    %c0_11 = arith.constant 0 : index
    %c0_12 = arith.constant 0 : index
    %5 = vector.load %arg2[%c0_8, %c0_9, %c1, %c0_10, %c0_11, %c0_12] : memref<1x1x4x2x16x72xf32, #tpu.memory_space<vmem>>, vector<1x1x1x1x16x64xf32>
    %6 = vector.shape_cast %5 : vector<1x1x1x1x16x64xf32> to vector<16x64xf32>
    %c0_13 = arith.constant 0 : index
    %c16 = arith.constant 16 : index
    %c0_14 = arith.constant 0 : index
    %7 = vector.load %arg6[%c0_13, %c16, %c0_14] : memref<4x144x64xf32, #tpu.memory_space<vmem>>, vector<1x16x64xf32>
    %8 = vector.shape_cast %7 : vector<1x16x64xf32> to vector<16x64xf32>
    %9 = vector.shape_cast %6 : vector<16x64xf32> to vector<1x16x64xf32>
    tpu.vector_store %arg6[%c0_13, %c16, %c0_14], %9 {strides = array<i32>} : memref<4x144x64xf32, #tpu.memory_space<vmem>>, vector<1x16x64xf32>,
    %c0_15 = arith.constant 0 : index
    %c0_16 = arith.constant 0 : index
    %c2 = arith.constant 2 : index
    %c0_17 = arith.constant 0 : index
    %c0_18 = arith.constant 0 : index
    %c0_19 = arith.constant 0 : index
    %10 = vector.load %arg2[%c0_15, %c0_16, %c2, %c0_17, %c0_18, %c0_19] : memref<1x1x4x2x16x72xf32, #tpu.memory_space<vmem>>, vector<1x1x1x1x16x64xf32>
    %11 = vector.shape_cast %10 : vector<1x1x1x1x16x64xf32> to vector<16x64xf32>
    %c0_20 = arith.constant 0 : index
    %c32 = arith.constant 32 : index
    %c0_21 = arith.constant 0 : index
    %12 = vector.load %arg6[%c0_20, %c32, %c0_21] : memref<4x144x64xf32, #tpu.memory_space<vmem>>, vector<1x16x64xf32>
    %13 = vector.shape_cast %12 : vector<1x16x64xf32> to vector<16x64xf32>
    %14 = vector.shape_cast %11 : vector<16x64xf32> to vector<1x16x64xf32>
    tpu.vector_store %arg6[%c0_20, %c32, %c0_21], %14 {strides = array<i32>} : memref<4x144x64xf32, #tpu.memory_space<vmem>>, vector<1x16x64xf32>,
    %c0_22 = arith.constant 0 : index
    %c0_23 = arith.constant 0 : index
    %c0_24 = arith.constant 0 : index
    %c1_25 = arith.constant 1 : index
    %c0_26 = arith.constant 0 : index
    %c0_27 = arith.constant 0 : index
    %15 = vector.load %arg2[%c0_22, %c0_23, %c0_24, %c1_25, %c0_26, %c0_27] : memref<1x1x4x2x16x72xf32, #tpu.memory_space<vmem>>, vector<1x1x1x1x16x64xf32>
    %16 = vector.shape_cast %15 : vector<1x1x1x1x16x64xf32> to vector<16x64xf32>
    %c0_28 = arith.constant 0 : index
    %c48 = arith.constant 48 : index
    %c0_29 = arith.constant 0 : index
    %17 = vector.load %arg6[%c0_28, %c48, %c0_29] : memref<4x144x64xf32, #tpu.memory_space<vmem>>, vector<1x16x64xf32>
    %18 = vector.shape_cast %17 : vector<1x16x64xf32> to vector<16x64xf32>
    %19 = vector.shape_cast %16 : vector<16x64xf32> to vector<1x16x64xf32>
    tpu.vector_store %arg6[%c0_28, %c48, %c0_29], %19 {strides = array<i32>} : memref<4x144x64xf32, #tpu.memory_space<vmem>>, vector<1x16x64xf32>,
    %c0_30 = arith.constant 0 : index
    %c0_31 = arith.constant 0 : index
    %c1_32 = arith.constant 1 : index
    %c1_33 = arith.constant 1 : index
    %c0_34 = arith.constant 0 : index
    %c0_35 = arith.constant 0 : index
    %20 = vector.load %arg2[%c0_30, %c0_31, %c1_32, %c1_33, %c0_34, %c0_35] : memref<1x1x4x2x16x72xf32, #tpu.memory_space<vmem>>, vector<1x1x1x1x16x64xf32>
    %21 = vector.shape_cast %20 : vector<1x1x1x1x16x64xf32> to vector<16x64xf32>
    %c0_36 = arith.constant 0 : index
    %c64 = arith.constant 64 : index
    %c0_37 = arith.constant 0 : index
    %22 = vector.load %arg6[%c0_36, %c64, %c0_37] : memref<4x144x64xf32, #tpu.memory_space<vmem>>, vector<1x16x64xf32>
    %23 = vector.shape_cast %22 : vector<1x16x64xf32> to vector<16x64xf32>
    %24 = vector.shape_cast %21 : vector<16x64xf32> to vector<1x16x64xf32>
    tpu.vector_store %arg6[%c0_36, %c64, %c0_37], %24 {strides = array<i32>} : memref<4x144x64xf32, #tpu.memory_space<vmem>>, vector<1x16x64xf32>,
    %c0_38 = arith.constant 0 : index
    %c0_39 = arith.constant 0 : index
    %c2_40 = arith.constant 2 : index
    %c1_41 = arith.constant 1 : index
    %c0_42 = arith.constant 0 : index
    %c0_43 = arith.constant 0 : index
    %25 = vector.load %arg2[%c0_38, %c0_39, %c2_40, %c1_41, %c0_42, %c0_43] : memref<1x1x4x2x16x72xf32, #tpu.memory_space<vmem>>, vector<1x1x1x1x16x64xf32>
    %26 = vector.shape_cast %25 : vector<1x1x1x1x16x64xf32> to vector<16x64xf32>
    %c0_44 = arith.constant 0 : index
    %c80 = arith.constant 80 : index
    %c0_45 = arith.constant 0 : index
    %27 = vector.load %arg6[%c0_44, %c80, %c0_45] : memref<4x144x64xf32, #tpu.memory_space<vmem>>, vector<1x16x64xf32>
    %28 = vector.shape_cast %27 : vector<1x16x64xf32> to vector<16x64xf32>
    %29 = vector.shape_cast %26 : vector<16x64xf32> to vector<1x16x64xf32>
    tpu.vector_store %arg6[%c0_44, %c80, %c0_45], %29 {strides = array<i32>} : memref<4x144x64xf32, #tpu.memory_space<vmem>>, vector<1x16x64xf32>,
    %c0_46 = arith.constant 0 : index
    %c0_47 = arith.constant 0 : index
    %c0_48 = arith.constant 0 : index
    %c0_49 = arith.constant 0 : index
    %c0_50 = arith.constant 0 : index
    %c8 = arith.constant 8 : index
    %30 = vector.load %arg2[%c0_46, %c0_47, %c0_48, %c0_49, %c0_50, %c8] : memref<1x1x4x2x16x72xf32, #tpu.memory_space<vmem>>, vector<1x1x1x1x16x64xf32>
    %31 = vector.shape_cast %30 : vector<1x1x1x1x16x64xf32> to vector<16x64xf32>
    %c0_51 = arith.constant 0 : index
    %c96 = arith.constant 96 : index
    %c0_52 = arith.constant 0 : index
    %32 = vector.load %arg6[%c0_51, %c96, %c0_52] : memref<4x144x64xf32, #tpu.memory_space<vmem>>, vector<1x16x64xf32>
    %33 = vector.shape_cast %32 : vector<1x16x64xf32> to vector<16x64xf32>
    %34 = vector.shape_cast %31 : vector<16x64xf32> to vector<1x16x64xf32>
    tpu.vector_store %arg6[%c0_51, %c96, %c0_52], %34 {strides = array<i32>} : memref<4x144x64xf32, #tpu.memory_space<vmem>>, vector<1x16x64xf32>,
    %c0_53 = arith.constant 0 : index
    %c0_54 = arith.constant 0 : index
    %c1_55 = arith.constant 1 : index
    %c0_56 = arith.constant 0 : index
    %c0_57 = arith.constant 0 : index
    %c8_58 = arith.constant 8 : index
    %35 = vector.load %arg2[%c0_53, %c0_54, %c1_55, %c0_56, %c0_57, %c8_58] : memref<1x1x4x2x16x72xf32, #tpu.memory_space<vmem>>, vector<1x1x1x1x16x64xf32>
    %36 = vector.shape_cast %35 : vector<1x1x1x1x16x64xf32> to vector<16x64xf32>
    %c0_59 = arith.constant 0 : index
    %c112 = arith.constant 112 : index
    %c0_60 = arith.constant 0 : index
    %37 = vector.load %arg6[%c0_59, %c112, %c0_60] : memref<4x144x64xf32, #tpu.memory_space<vmem>>, vector<1x16x64xf32>
    %38 = vector.shape_cast %37 : vector<1x16x64xf32> to vector<16x64xf32>
    %39 = vector.shape_cast %36 : vector<16x64xf32> to vector<1x16x64xf32>
    tpu.vector_store %arg6[%c0_59, %c112, %c0_60], %39 {strides = array<i32>} : memref<4x144x64xf32, #tpu.memory_space<vmem>>, vector<1x16x64xf32>,
    %c0_61 = arith.constant 0 : index
    %c0_62 = arith.constant 0 : index
    %c2_63 = arith.constant 2 : index
    %c0_64 = arith.constant 0 : index
    %c0_65 = arith.constant 0 : index
    %c8_66 = arith.constant 8 : index
    %40 = vector.load %arg2[%c0_61, %c0_62, %c2_63, %c0_64, %c0_65, %c8_66] : memref<1x1x4x2x16x72xf32, #tpu.memory_space<vmem>>, vector<1x1x1x1x16x64xf32>
    %41 = vector.shape_cast %40 : vector<1x1x1x1x16x64xf32> to vector<16x64xf32>
    %c0_67 = arith.constant 0 : index
    %c128 = arith.constant 128 : index
    %c0_68 = arith.constant 0 : index
    %42 = vector.load %arg6[%c0_67, %c128, %c0_68] : memref<4x144x64xf32, #tpu.memory_space<vmem>>, vector<1x16x64xf32>
    %43 = vector.shape_cast %42 : vector<1x16x64xf32> to vector<16x64xf32>
    %44 = vector.shape_cast %41 : vector<16x64xf32> to vector<1x16x64xf32>
    tpu.vector_store %arg6[%c0_67, %c128, %c0_68], %44 {strides = array<i32>} : memref<4x144x64xf32, #tpu.memory_space<vmem>>, vector<1x16x64xf32>,
    %c0_69 = arith.constant 0 : index
    %c0_70 = arith.constant 0 : index
    %c1_71 = arith.constant 1 : index
    %c0_72 = arith.constant 0 : index
    %c0_73 = arith.constant 0 : index
    %c0_74 = arith.constant 0 : index
    %45 = vector.load %arg2[%c0_69, %c0_70, %c1_71, %c0_72, %c0_73, %c0_74] : memref<1x1x4x2x16x72xf32, #tpu.memory_space<vmem>>, vector<1x1x1x1x16x64xf32>
    %46 = vector.shape_cast %45 : vector<1x1x1x1x16x64xf32> to vector<16x64xf32>
    %c1_75 = arith.constant 1 : index
    %c0_76 = arith.constant 0 : index
    %c0_77 = arith.constant 0 : index
    %47 = vector.load %arg6[%c1_75, %c0_76, %c0_77] : memref<4x144x64xf32, #tpu.memory_space<vmem>>, vector<1x16x64xf32>
    %48 = vector.shape_cast %47 : vector<1x16x64xf32> to vector<16x64xf32>
    %49 = vector.shape_cast %46 : vector<16x64xf32> to vector<1x16x64xf32>
    tpu.vector_store %arg6[%c1_75, %c0_76, %c0_77], %49 {strides = array<i32>} : memref<4x144x64xf32, #tpu.memory_space<vmem>>, vector<1x16x64xf32>,
    %c0_78 = arith.constant 0 : index
    %c0_79 = arith.constant 0 : index
    %c2_80 = arith.constant 2 : index
    %c0_81 = arith.constant 0 : index
    %c0_82 = arith.constant 0 : index
    %c0_83 = arith.constant 0 : index
    %50 = vector.load %arg2[%c0_78, %c0_79, %c2_80, %c0_81, %c0_82, %c0_83] : memref<1x1x4x2x16x72xf32, #tpu.memory_space<vmem>>, vector<1x1x1x1x16x64xf32>
    %51 = vector.shape_cast %50 : vector<1x1x1x1x16x64xf32> to vector<16x64xf32>
    %c1_84 = arith.constant 1 : index
    %c16_85 = arith.constant 16 : index
    %c0_86 = arith.constant 0 : index
    %52 = vector.load %arg6[%c1_84, %c16_85, %c0_86] : memref<4x144x64xf32, #tpu.memory_space<vmem>>, vector<1x16x64xf32>
    %53 = vector.shape_cast %52 : vector<1x16x64xf32> to vector<16x64xf32>
    %54 = vector.shape_cast %51 : vector<16x64xf32> to vector<1x16x64xf32>
    tpu.vector_store %arg6[%c1_84, %c16_85, %c0_86], %54 {strides = array<i32>} : memref<4x144x64xf32, #tpu.memory_space<vmem>>, vector<1x16x64xf32>,
    %c0_87 = arith.constant 0 : index
    %c0_88 = arith.constant 0 : index
    %c3 = arith.constant 3 : index
    %c0_89 = arith.constant 0 : index
    %c0_90 = arith.constant 0 : index
    %c0_91 = arith.constant 0 : index
    %55 = vector.load %arg2[%c0_87, %c0_88, %c3, %c0_89, %c0_90, %c0_91] : memref<1x1x4x2x16x72xf32, #tpu.memory_space<vmem>>, vector<1x1x1x1x16x64xf32>
    %56 = vector.shape_cast %55 : vector<1x1x1x1x16x64xf32> to vector<16x64xf32>
    %c1_92 = arith.constant 1 : index
    %c32_93 = arith.constant 32 : index
    %c0_94 = arith.constant 0 : index
    %57 = vector.load %arg6[%c1_92, %c32_93, %c0_94] : memref<4x144x64xf32, #tpu.memory_space<vmem>>, vector<1x16x64xf32>
    %58 = vector.shape_cast %57 : vector<1x16x64xf32> to vector<16x64xf32>
    %59 = vector.shape_cast %56 : vector<16x64xf32> to vector<1x16x64xf32>
    tpu.vector_store %arg6[%c1_92, %c32_93, %c0_94], %59 {strides = array<i32>} : memref<4x144x64xf32, #tpu.memory_space<vmem>>, vector<1x16x64xf32>,
    %c0_95 = arith.constant 0 : index
    %c0_96 = arith.constant 0 : index
    %c1_97 = arith.constant 1 : index
    %c1_98 = arith.constant 1 : index
    %c0_99 = arith.constant 0 : index
    %c0_100 = arith.constant 0 : index
    %60 = vector.load %arg2[%c0_95, %c0_96, %c1_97, %c1_98, %c0_99, %c0_100] : memref<1x1x4x2x16x72xf32, #tpu.memory_space<vmem>>, vector<1x1x1x1x16x64xf32>
    %61 = vector.shape_cast %60 : vector<1x1x1x1x16x64xf32> to vector<16x64xf32>
    %c1_101 = arith.constant 1 : index
    %c48_102 = arith.constant 48 : index
    %c0_103 = arith.constant 0 : index
    %62 = vector.load %arg6[%c1_101, %c48_102, %c0_103] : memref<4x144x64xf32, #tpu.memory_space<vmem>>, vector<1x16x64xf32>
    %63 = vector.shape_cast %62 : vector<1x16x64xf32> to vector<16x64xf32>
    %64 = vector.shape_cast %61 : vector<16x64xf32> to vector<1x16x64xf32>
    tpu.vector_store %arg6[%c1_101, %c48_102, %c0_103], %64 {strides = array<i32>} : memref<4x144x64xf32, #tpu.memory_space<vmem>>, vector<1x16x64xf32>,
    %c0_104 = arith.constant 0 : index
    %c0_105 = arith.constant 0 : index
    %c2_106 = arith.constant 2 : index
    %c1_107 = arith.constant 1 : index
    %c0_108 = arith.constant 0 : index
    %c0_109 = arith.constant 0 : index
    %65 = vector.load %arg2[%c0_104, %c0_105, %c2_106, %c1_107, %c0_108, %c0_109] : memref<1x1x4x2x16x72xf32, #tpu.memory_space<vmem>>, vector<1x1x1x1x16x64xf32>
    %66 = vector.shape_cast %65 : vector<1x1x1x1x16x64xf32> to vector<16x64xf32>
    %c1_110 = arith.constant 1 : index
    %c64_111 = arith.constant 64 : index
    %c0_112 = arith.constant 0 : index
    %67 = vector.load %arg6[%c1_110, %c64_111, %c0_112] : memref<4x144x64xf32, #tpu.memory_space<vmem>>, vector<1x16x64xf32>
    %68 = vector.shape_cast %67 : vector<1x16x64xf32> to vector<16x64xf32>
    %69 = vector.shape_cast %66 : vector<16x64xf32> to vector<1x16x64xf32>
    tpu.vector_store %arg6[%c1_110, %c64_111, %c0_112], %69 {strides = array<i32>} : memref<4x144x64xf32, #tpu.memory_space<vmem>>, vector<1x16x64xf32>,
    %c0_113 = arith.constant 0 : index
    %c0_114 = arith.constant 0 : index
    %c3_115 = arith.constant 3 : index
    %c1_116 = arith.constant 1 : index
    %c0_117 = arith.constant 0 : index
    %c0_118 = arith.constant 0 : index
    %70 = vector.load %arg2[%c0_113, %c0_114, %c3_115, %c1_116, %c0_117, %c0_118] : memref<1x1x4x2x16x72xf32, #tpu.memory_space<vmem>>, vector<1x1x1x1x16x64xf32>
    %71 = vector.shape_cast %70 : vector<1x1x1x1x16x64xf32> to vector<16x64xf32>
    %c1_119 = arith.constant 1 : index
    %c80_120 = arith.constant 80 : index
    %c0_121 = arith.constant 0 : index
    %72 = vector.load %arg6[%c1_119, %c80_120, %c0_121] : memref<4x144x64xf32, #tpu.memory_space<vmem>>, vector<1x16x64xf32>
    %73 = vector.shape_cast %72 : vector<1x16x64xf32> to vector<16x64xf32>
    %74 = vector.shape_cast %71 : vector<16x64xf32> to vector<1x16x64xf32>
    tpu.vector_store %arg6[%c1_119, %c80_120, %c0_121], %74 {strides = array<i32>} : memref<4x144x64xf32, #tpu.memory_space<vmem>>, vector<1x16x64xf32>,
    %c0_122 = arith.constant 0 : index
    %c0_123 = arith.constant 0 : index
    %c1_124 = arith.constant 1 : index
    %c0_125 = arith.constant 0 : index
    %c0_126 = arith.constant 0 : index
    %c8_127 = arith.constant 8 : index
    %75 = vector.load %arg2[%c0_122, %c0_123, %c1_124, %c0_125, %c0_126, %c8_127] : memref<1x1x4x2x16x72xf32, #tpu.memory_space<vmem>>, vector<1x1x1x1x16x64xf32>
    %76 = vector.shape_cast %75 : vector<1x1x1x1x16x64xf32> to vector<16x64xf32>
    %c1_128 = arith.constant 1 : index
    %c96_129 = arith.constant 96 : index
    %c0_130 = arith.constant 0 : index
    %77 = vector.load %arg6[%c1_128, %c96_129, %c0_130] : memref<4x144x64xf32, #tpu.memory_space<vmem>>, vector<1x16x64xf32>
    %78 = vector.shape_cast %77 : vector<1x16x64xf32> to vector<16x64xf32>
    %79 = vector.shape_cast %76 : vector<16x64xf32> to vector<1x16x64xf32>
    tpu.vector_store %arg6[%c1_128, %c96_129, %c0_130], %79 {strides = array<i32>} : memref<4x144x64xf32, #tpu.memory_space<vmem>>, vector<1x16x64xf32>,
    %c0_131 = arith.constant 0 : index
    %c0_132 = arith.constant 0 : index
    %c2_133 = arith.constant 2 : index
    %c0_134 = arith.constant 0 : index
    %c0_135 = arith.constant 0 : index
    %c8_136 = arith.constant 8 : index
    %80 = vector.load %arg2[%c0_131, %c0_132, %c2_133, %c0_134, %c0_135, %c8_136] : memref<1x1x4x2x16x72xf32, #tpu.memory_space<vmem>>, vector<1x1x1x1x16x64xf32>
    %81 = vector.shape_cast %80 : vector<1x1x1x1x16x64xf32> to vector<16x64xf32>
    %c1_137 = arith.constant 1 : index
    %c112_138 = arith.constant 112 : index
    %c0_139 = arith.constant 0 : index
    %82 = vector.load %arg6[%c1_137, %c112_138, %c0_139] : memref<4x144x64xf32, #tpu.memory_space<vmem>>, vector<1x16x64xf32>
    %83 = vector.shape_cast %82 : vector<1x16x64xf32> to vector<16x64xf32>
    %84 = vector.shape_cast %81 : vector<16x64xf32> to vector<1x16x64xf32>
    tpu.vector_store %arg6[%c1_137, %c112_138, %c0_139], %84 {strides = array<i32>} : memref<4x144x64xf32, #tpu.memory_space<vmem>>, vector<1x16x64xf32>,
    %c0_140 = arith.constant 0 : index
    %c0_141 = arith.constant 0 : index
    %c3_142 = arith.constant 3 : index
    %c0_143 = arith.constant 0 : index
    %c0_144 = arith.constant 0 : index
    %c8_145 = arith.constant 8 : index
    %85 = vector.load %arg2[%c0_140, %c0_141, %c3_142, %c0_143, %c0_144, %c8_145] : memref<1x1x4x2x16x72xf32, #tpu.memory_space<vmem>>, vector<1x1x1x1x16x64xf32>
    %86 = vector.shape_cast %85 : vector<1x1x1x1x16x64xf32> to vector<16x64xf32>
    %c1_146 = arith.constant 1 : index
    %c128_147 = arith.constant 128 : index
    %c0_148 = arith.constant 0 : index
    %87 = vector.load %arg6[%c1_146, %c128_147, %c0_148] : memref<4x144x64xf32, #tpu.memory_space<vmem>>, vector<1x16x64xf32>
    %88 = vector.shape_cast %87 : vector<1x16x64xf32> to vector<16x64xf32>
    %89 = vector.shape_cast %86 : vector<16x64xf32> to vector<1x16x64xf32>
    tpu.vector_store %arg6[%c1_146, %c128_147, %c0_148], %89 {strides = array<i32>} : memref<4x144x64xf32, #tpu.memory_space<vmem>>, vector<1x16x64xf32>,
    %c0_149 = arith.constant 0 : index
    %c0_150 = arith.constant 0 : index
    %c0_151 = arith.constant 0 : index
    %c1_152 = arith.constant 1 : index
    %c0_153 = arith.constant 0 : index
    %c0_154 = arith.constant 0 : index
    %90 = vector.load %arg2[%c0_149, %c0_150, %c0_151, %c1_152, %c0_153, %c0_154] : memref<1x1x4x2x16x72xf32, #tpu.memory_space<vmem>>, vector<1x1x1x1x16x64xf32>
    %91 = vector.shape_cast %90 : vector<1x1x1x1x16x64xf32> to vector<16x64xf32>
    %c2_155 = arith.constant 2 : index
    %c0_156 = arith.constant 0 : index
    %c0_157 = arith.constant 0 : index
    %92 = vector.load %arg6[%c2_155, %c0_156, %c0_157] : memref<4x144x64xf32, #tpu.memory_space<vmem>>, vector<1x16x64xf32>
    %93 = vector.shape_cast %92 : vector<1x16x64xf32> to vector<16x64xf32>
    %94 = vector.shape_cast %91 : vector<16x64xf32> to vector<1x16x64xf32>
    tpu.vector_store %arg6[%c2_155, %c0_156, %c0_157], %94 {strides = array<i32>} : memref<4x144x64xf32, #tpu.memory_space<vmem>>, vector<1x16x64xf32>,
    %c0_158 = arith.constant 0 : index
    %c0_159 = arith.constant 0 : index
    %c1_160 = arith.constant 1 : index
    %c1_161 = arith.constant 1 : index
    %c0_162 = arith.constant 0 : index
    %c0_163 = arith.constant 0 : index
    %95 = vector.load %arg2[%c0_158, %c0_159, %c1_160, %c1_161, %c0_162, %c0_163] : memref<1x1x4x2x16x72xf32, #tpu.memory_space<vmem>>, vector<1x1x1x1x16x64xf32>
    %96 = vector.shape_cast %95 : vector<1x1x1x1x16x64xf32> to vector<16x64xf32>
    %c2_164 = arith.constant 2 : index
    %c16_165 = arith.constant 16 : index
    %c0_166 = arith.constant 0 : index
    %97 = vector.load %arg6[%c2_164, %c16_165, %c0_166] : memref<4x144x64xf32, #tpu.memory_space<vmem>>, vector<1x16x64xf32>
    %98 = vector.shape_cast %97 : vector<1x16x64xf32> to vector<16x64xf32>
    %99 = vector.shape_cast %96 : vector<16x64xf32> to vector<1x16x64xf32>
    tpu.vector_store %arg6[%c2_164, %c16_165, %c0_166], %99 {strides = array<i32>} : memref<4x144x64xf32, #tpu.memory_space<vmem>>, vector<1x16x64xf32>,
    %c0_167 = arith.constant 0 : index
    %c0_168 = arith.constant 0 : index
    %c2_169 = arith.constant 2 : index
    %c1_170 = arith.constant 1 : index
    %c0_171 = arith.constant 0 : index
    %c0_172 = arith.constant 0 : index
    %100 = vector.load %arg2[%c0_167, %c0_168, %c2_169, %c1_170, %c0_171, %c0_172] : memref<1x1x4x2x16x72xf32, #tpu.memory_space<vmem>>, vector<1x1x1x1x16x64xf32>
    %101 = vector.shape_cast %100 : vector<1x1x1x1x16x64xf32> to vector<16x64xf32>
    %c2_173 = arith.constant 2 : index
    %c32_174 = arith.constant 32 : index
    %c0_175 = arith.constant 0 : index
    %102 = vector.load %arg6[%c2_173, %c32_174, %c0_175] : memref<4x144x64xf32, #tpu.memory_space<vmem>>, vector<1x16x64xf32>
    %103 = vector.shape_cast %102 : vector<1x16x64xf32> to vector<16x64xf32>
    %104 = vector.shape_cast %101 : vector<16x64xf32> to vector<1x16x64xf32>
    tpu.vector_store %arg6[%c2_173, %c32_174, %c0_175], %104 {strides = array<i32>} : memref<4x144x64xf32, #tpu.memory_space<vmem>>, vector<1x16x64xf32>,
    %c0_176 = arith.constant 0 : index
    %c0_177 = arith.constant 0 : index
    %c0_178 = arith.constant 0 : index
    %c0_179 = arith.constant 0 : index
    %c0_180 = arith.constant 0 : index
    %c8_181 = arith.constant 8 : index
    %105 = vector.load %arg2[%c0_176, %c0_177, %c0_178, %c0_179, %c0_180, %c8_181] : memref<1x1x4x2x16x72xf32, #tpu.memory_space<vmem>>, vector<1x1x1x1x16x64xf32>
    %106 = vector.shape_cast %105 : vector<1x1x1x1x16x64xf32> to vector<16x64xf32>
    %c2_182 = arith.constant 2 : index
    %c48_183 = arith.constant 48 : index
    %c0_184 = arith.constant 0 : index
    %107 = vector.load %arg6[%c2_182, %c48_183, %c0_184] : memref<4x144x64xf32, #tpu.memory_space<vmem>>, vector<1x16x64xf32>
    %108 = vector.shape_cast %107 : vector<1x16x64xf32> to vector<16x64xf32>
    %109 = vector.shape_cast %106 : vector<16x64xf32> to vector<1x16x64xf32>
    tpu.vector_store %arg6[%c2_182, %c48_183, %c0_184], %109 {strides = array<i32>} : memref<4x144x64xf32, #tpu.memory_space<vmem>>, vector<1x16x64xf32>,
    %c0_185 = arith.constant 0 : index
    %c0_186 = arith.constant 0 : index
    %c1_187 = arith.constant 1 : index
    %c0_188 = arith.constant 0 : index
    %c0_189 = arith.constant 0 : index
    %c8_190 = arith.constant 8 : index
    %110 = vector.load %arg2[%c0_185, %c0_186, %c1_187, %c0_188, %c0_189, %c8_190] : memref<1x1x4x2x16x72xf32, #tpu.memory_space<vmem>>, vector<1x1x1x1x16x64xf32>
    %111 = vector.shape_cast %110 : vector<1x1x1x1x16x64xf32> to vector<16x64xf32>
    %c2_191 = arith.constant 2 : index
    %c64_192 = arith.constant 64 : index
    %c0_193 = arith.constant 0 : index
    %112 = vector.load %arg6[%c2_191, %c64_192, %c0_193] : memref<4x144x64xf32, #tpu.memory_space<vmem>>, vector<1x16x64xf32>
    %113 = vector.shape_cast %112 : vector<1x16x64xf32> to vector<16x64xf32>
    %114 = vector.shape_cast %111 : vector<16x64xf32> to vector<1x16x64xf32>
    tpu.vector_store %arg6[%c2_191, %c64_192, %c0_193], %114 {strides = array<i32>} : memref<4x144x64xf32, #tpu.memory_space<vmem>>, vector<1x16x64xf32>,
    %c0_194 = arith.constant 0 : index
    %c0_195 = arith.constant 0 : index
    %c2_196 = arith.constant 2 : index
    %c0_197 = arith.constant 0 : index
    %c0_198 = arith.constant 0 : index
    %c8_199 = arith.constant 8 : index
    %115 = vector.load %arg2[%c0_194, %c0_195, %c2_196, %c0_197, %c0_198, %c8_199] : memref<1x1x4x2x16x72xf32, #tpu.memory_space<vmem>>, vector<1x1x1x1x16x64xf32>
    %116 = vector.shape_cast %115 : vector<1x1x1x1x16x64xf32> to vector<16x64xf32>
    %c2_200 = arith.constant 2 : index
    %c80_201 = arith.constant 80 : index
    %c0_202 = arith.constant 0 : index
    %117 = vector.load %arg6[%c2_200, %c80_201, %c0_202] : memref<4x144x64xf32, #tpu.memory_space<vmem>>, vector<1x16x64xf32>
    %118 = vector.shape_cast %117 : vector<1x16x64xf32> to vector<16x64xf32>
    %119 = vector.shape_cast %116 : vector<16x64xf32> to vector<1x16x64xf32>
    tpu.vector_store %arg6[%c2_200, %c80_201, %c0_202], %119 {strides = array<i32>} : memref<4x144x64xf32, #tpu.memory_space<vmem>>, vector<1x16x64xf32>,
    %c0_203 = arith.constant 0 : index
    %c0_204 = arith.constant 0 : index
    %c0_205 = arith.constant 0 : index
    %c1_206 = arith.constant 1 : index
    %c0_207 = arith.constant 0 : index
    %c8_208 = arith.constant 8 : index
    %120 = vector.load %arg2[%c0_203, %c0_204, %c0_205, %c1_206, %c0_207, %c8_208] : memref<1x1x4x2x16x72xf32, #tpu.memory_space<vmem>>, vector<1x1x1x1x16x64xf32>
    %121 = vector.shape_cast %120 : vector<1x1x1x1x16x64xf32> to vector<16x64xf32>
    %c2_209 = arith.constant 2 : index
    %c96_210 = arith.constant 96 : index
    %c0_211 = arith.constant 0 : index
    %122 = vector.load %arg6[%c2_209, %c96_210, %c0_211] : memref<4x144x64xf32, #tpu.memory_space<vmem>>, vector<1x16x64xf32>
    %123 = vector.shape_cast %122 : vector<1x16x64xf32> to vector<16x64xf32>
    %124 = vector.shape_cast %121 : vector<16x64xf32> to vector<1x16x64xf32>
    tpu.vector_store %arg6[%c2_209, %c96_210, %c0_211], %124 {strides = array<i32>} : memref<4x144x64xf32, #tpu.memory_space<vmem>>, vector<1x16x64xf32>,
    %c0_212 = arith.constant 0 : index
    %c0_213 = arith.constant 0 : index
    %c1_214 = arith.constant 1 : index
    %c1_215 = arith.constant 1 : index
    %c0_216 = arith.constant 0 : index
    %c8_217 = arith.constant 8 : index
    %125 = vector.load %arg2[%c0_212, %c0_213, %c1_214, %c1_215, %c0_216, %c8_217] : memref<1x1x4x2x16x72xf32, #tpu.memory_space<vmem>>, vector<1x1x1x1x16x64xf32>
    %126 = vector.shape_cast %125 : vector<1x1x1x1x16x64xf32> to vector<16x64xf32>
    %c2_218 = arith.constant 2 : index
    %c112_219 = arith.constant 112 : index
    %c0_220 = arith.constant 0 : index
    %127 = vector.load %arg6[%c2_218, %c112_219, %c0_220] : memref<4x144x64xf32, #tpu.memory_space<vmem>>, vector<1x16x64xf32>
    %128 = vector.shape_cast %127 : vector<1x16x64xf32> to vector<16x64xf32>
    %129 = vector.shape_cast %126 : vector<16x64xf32> to vector<1x16x64xf32>
    tpu.vector_store %arg6[%c2_218, %c112_219, %c0_220], %129 {strides = array<i32>} : memref<4x144x64xf32, #tpu.memory_space<vmem>>, vector<1x16x64xf32>,
    %c0_221 = arith.constant 0 : index
    %c0_222 = arith.constant 0 : index
    %c2_223 = arith.constant 2 : index
    %c1_224 = arith.constant 1 : index
    %c0_225 = arith.constant 0 : index
    %c8_226 = arith.constant 8 : index
    %130 = vector.load %arg2[%c0_221, %c0_222, %c2_223, %c1_224, %c0_225, %c8_226] : memref<1x1x4x2x16x72xf32, #tpu.memory_space<vmem>>, vector<1x1x1x1x16x64xf32>
    %131 = vector.shape_cast %130 : vector<1x1x1x1x16x64xf32> to vector<16x64xf32>
    %c2_227 = arith.constant 2 : index
    %c128_228 = arith.constant 128 : index
    %c0_229 = arith.constant 0 : index
    %132 = vector.load %arg6[%c2_227, %c128_228, %c0_229] : memref<4x144x64xf32, #tpu.memory_space<vmem>>, vector<1x16x64xf32>
    %133 = vector.shape_cast %132 : vector<1x16x64xf32> to vector<16x64xf32>
    %134 = vector.shape_cast %131 : vector<16x64xf32> to vector<1x16x64xf32>
    tpu.vector_store %arg6[%c2_227, %c128_228, %c0_229], %134 {strides = array<i32>} : memref<4x144x64xf32, #tpu.memory_space<vmem>>, vector<1x16x64xf32>,
    %c0_230 = arith.constant 0 : index
    %c0_231 = arith.constant 0 : index
    %c1_232 = arith.constant 1 : index
    %c1_233 = arith.constant 1 : index
    %c0_234 = arith.constant 0 : index
    %c0_235 = arith.constant 0 : index
    %135 = vector.load %arg2[%c0_230, %c0_231, %c1_232, %c1_233, %c0_234, %c0_235] : memref<1x1x4x2x16x72xf32, #tpu.memory_space<vmem>>, vector<1x1x1x1x16x64xf32>
    %136 = vector.shape_cast %135 : vector<1x1x1x1x16x64xf32> to vector<16x64xf32>
    %c3_236 = arith.constant 3 : index
    %c0_237 = arith.constant 0 : index
    %c0_238 = arith.constant 0 : index
    %137 = vector.load %arg6[%c3_236, %c0_237, %c0_238] : memref<4x144x64xf32, #tpu.memory_space<vmem>>, vector<1x16x64xf32>
    %138 = vector.shape_cast %137 : vector<1x16x64xf32> to vector<16x64xf32>
    %139 = vector.shape_cast %136 : vector<16x64xf32> to vector<1x16x64xf32>
    tpu.vector_store %arg6[%c3_236, %c0_237, %c0_238], %139 {strides = array<i32>} : memref<4x144x64xf32, #tpu.memory_space<vmem>>, vector<1x16x64xf32>,
    %c0_239 = arith.constant 0 : index
    %c0_240 = arith.constant 0 : index
    %c2_241 = arith.constant 2 : index
    %c1_242 = arith.constant 1 : index
    %c0_243 = arith.constant 0 : index
    %c0_244 = arith.constant 0 : index
    %140 = vector.load %arg2[%c0_239, %c0_240, %c2_241, %c1_242, %c0_243, %c0_244] : memref<1x1x4x2x16x72xf32, #tpu.memory_space<vmem>>, vector<1x1x1x1x16x64xf32>
    %141 = vector.shape_cast %140 : vector<1x1x1x1x16x64xf32> to vector<16x64xf32>
    %c3_245 = arith.constant 3 : index
    %c16_246 = arith.constant 16 : index
    %c0_247 = arith.constant 0 : index
    %142 = vector.load %arg6[%c3_245, %c16_246, %c0_247] : memref<4x144x64xf32, #tpu.memory_space<vmem>>, vector<1x16x64xf32>
    %143 = vector.shape_cast %142 : vector<1x16x64xf32> to vector<16x64xf32>
    %144 = vector.shape_cast %141 : vector<16x64xf32> to vector<1x16x64xf32>
    tpu.vector_store %arg6[%c3_245, %c16_246, %c0_247], %144 {strides = array<i32>} : memref<4x144x64xf32, #tpu.memory_space<vmem>>, vector<1x16x64xf32>,
    %c0_248 = arith.constant 0 : index
    %c0_249 = arith.constant 0 : index
    %c3_250 = arith.constant 3 : index
    %c1_251 = arith.constant 1 : index
    %c0_252 = arith.constant 0 : index
    %c0_253 = arith.constant 0 : index
    %145 = vector.load %arg2[%c0_248, %c0_249, %c3_250, %c1_251, %c0_252, %c0_253] : memref<1x1x4x2x16x72xf32, #tpu.memory_space<vmem>>, vector<1x1x1x1x16x64xf32>
    %146 = vector.shape_cast %145 : vector<1x1x1x1x16x64xf32> to vector<16x64xf32>
    %c3_254 = arith.constant 3 : index
    %c32_255 = arith.constant 32 : index
    %c0_256 = arith.constant 0 : index
    %147 = vector.load %arg6[%c3_254, %c32_255, %c0_256] : memref<4x144x64xf32, #tpu.memory_space<vmem>>, vector<1x16x64xf32>
    %148 = vector.shape_cast %147 : vector<1x16x64xf32> to vector<16x64xf32>
    %149 = vector.shape_cast %146 : vector<16x64xf32> to vector<1x16x64xf32>
    tpu.vector_store %arg6[%c3_254, %c32_255, %c0_256], %149 {strides = array<i32>} : memref<4x144x64xf32, #tpu.memory_space<vmem>>, vector<1x16x64xf32>,
    %c0_257 = arith.constant 0 : index
    %c0_258 = arith.constant 0 : index
    %c1_259 = arith.constant 1 : index
    %c0_260 = arith.constant 0 : index
    %c0_261 = arith.constant 0 : index
    %c8_262 = arith.constant 8 : index
    %150 = vector.load %arg2[%c0_257, %c0_258, %c1_259, %c0_260, %c0_261, %c8_262] : memref<1x1x4x2x16x72xf32, #tpu.memory_space<vmem>>, vector<1x1x1x1x16x64xf32>
    %151 = vector.shape_cast %150 : vector<1x1x1x1x16x64xf32> to vector<16x64xf32>
    %c3_263 = arith.constant 3 : index
    %c48_264 = arith.constant 48 : index
    %c0_265 = arith.constant 0 : index
    %152 = vector.load %arg6[%c3_263, %c48_264, %c0_265] : memref<4x144x64xf32, #tpu.memory_space<vmem>>, vector<1x16x64xf32>
    %153 = vector.shape_cast %152 : vector<1x16x64xf32> to vector<16x64xf32>
    %154 = vector.shape_cast %151 : vector<16x64xf32> to vector<1x16x64xf32>
    tpu.vector_store %arg6[%c3_263, %c48_264, %c0_265], %154 {strides = array<i32>} : memref<4x144x64xf32, #tpu.memory_space<vmem>>, vector<1x16x64xf32>,
    %c0_266 = arith.constant 0 : index
    %c0_267 = arith.constant 0 : index
    %c2_268 = arith.constant 2 : index
    %c0_269 = arith.constant 0 : index
    %c0_270 = arith.constant 0 : index
    %c8_271 = arith.constant 8 : index
    %155 = vector.load %arg2[%c0_266, %c0_267, %c2_268, %c0_269, %c0_270, %c8_271] : memref<1x1x4x2x16x72xf32, #tpu.memory_space<vmem>>, vector<1x1x1x1x16x64xf32>
    %156 = vector.shape_cast %155 : vector<1x1x1x1x16x64xf32> to vector<16x64xf32>
    %c3_272 = arith.constant 3 : index
    %c64_273 = arith.constant 64 : index
    %c0_274 = arith.constant 0 : index
    %157 = vector.load %arg6[%c3_272, %c64_273, %c0_274] : memref<4x144x64xf32, #tpu.memory_space<vmem>>, vector<1x16x64xf32>
    %158 = vector.shape_cast %157 : vector<1x16x64xf32> to vector<16x64xf32>
    %159 = vector.shape_cast %156 : vector<16x64xf32> to vector<1x16x64xf32>
    tpu.vector_store %arg6[%c3_272, %c64_273, %c0_274], %159 {strides = array<i32>} : memref<4x144x64xf32, #tpu.memory_space<vmem>>, vector<1x16x64xf32>,
    %c0_275 = arith.constant 0 : index
    %c0_276 = arith.constant 0 : index
    %c3_277 = arith.constant 3 : index
    %c0_278 = arith.constant 0 : index
    %c0_279 = arith.constant 0 : index
    %c8_280 = arith.constant 8 : index
    %160 = vector.load %arg2[%c0_275, %c0_276, %c3_277, %c0_278, %c0_279, %c8_280] : memref<1x1x4x2x16x72xf32, #tpu.memory_space<vmem>>, vector<1x1x1x1x16x64xf32>
    %161 = vector.shape_cast %160 : vector<1x1x1x1x16x64xf32> to vector<16x64xf32>
    %c3_281 = arith.constant 3 : index
    %c80_282 = arith.constant 80 : index
    %c0_283 = arith.constant 0 : index
    %162 = vector.load %arg6[%c3_281, %c80_282, %c0_283] : memref<4x144x64xf32, #tpu.memory_space<vmem>>, vector<1x16x64xf32>
    %163 = vector.shape_cast %162 : vector<1x16x64xf32> to vector<16x64xf32>
    %164 = vector.shape_cast %161 : vector<16x64xf32> to vector<1x16x64xf32>
    tpu.vector_store %arg6[%c3_281, %c80_282, %c0_283], %164 {strides = array<i32>} : memref<4x144x64xf32, #tpu.memory_space<vmem>>, vector<1x16x64xf32>,
    %c0_284 = arith.constant 0 : index
    %c0_285 = arith.constant 0 : index
    %c1_286 = arith.constant 1 : index
    %c1_287 = arith.constant 1 : index
    %c0_288 = arith.constant 0 : index
    %c8_289 = arith.constant 8 : index
    %165 = vector.load %arg2[%c0_284, %c0_285, %c1_286, %c1_287, %c0_288, %c8_289] : memref<1x1x4x2x16x72xf32, #tpu.memory_space<vmem>>, vector<1x1x1x1x16x64xf32>
    %166 = vector.shape_cast %165 : vector<1x1x1x1x16x64xf32> to vector<16x64xf32>
    %c3_290 = arith.constant 3 : index
    %c96_291 = arith.constant 96 : index
    %c0_292 = arith.constant 0 : index
    %167 = vector.load %arg6[%c3_290, %c96_291, %c0_292] : memref<4x144x64xf32, #tpu.memory_space<vmem>>, vector<1x16x64xf32>
    %168 = vector.shape_cast %167 : vector<1x16x64xf32> to vector<16x64xf32>
    %169 = vector.shape_cast %166 : vector<16x64xf32> to vector<1x16x64xf32>
    tpu.vector_store %arg6[%c3_290, %c96_291, %c0_292], %169 {strides = array<i32>} : memref<4x144x64xf32, #tpu.memory_space<vmem>>, vector<1x16x64xf32>,
    %c0_293 = arith.constant 0 : index
    %c0_294 = arith.constant 0 : index
    %c2_295 = arith.constant 2 : index
    %c1_296 = arith.constant 1 : index
    %c0_297 = arith.constant 0 : index
    %c8_298 = arith.constant 8 : index
    %170 = vector.load %arg2[%c0_293, %c0_294, %c2_295, %c1_296, %c0_297, %c8_298] : memref<1x1x4x2x16x72xf32, #tpu.memory_space<vmem>>, vector<1x1x1x1x16x64xf32>
    %171 = vector.shape_cast %170 : vector<1x1x1x1x16x64xf32> to vector<16x64xf32>
    %c3_299 = arith.constant 3 : index
    %c112_300 = arith.constant 112 : index
    %c0_301 = arith.constant 0 : index
    %172 = vector.load %arg6[%c3_299, %c112_300, %c0_301] : memref<4x144x64xf32, #tpu.memory_space<vmem>>, vector<1x16x64xf32>
    %173 = vector.shape_cast %172 : vector<1x16x64xf32> to vector<16x64xf32>
    %174 = vector.shape_cast %171 : vector<16x64xf32> to vector<1x16x64xf32>
    tpu.vector_store %arg6[%c3_299, %c112_300, %c0_301], %174 {strides = array<i32>} : memref<4x144x64xf32, #tpu.memory_space<vmem>>, vector<1x16x64xf32>,
    %c0_302 = arith.constant 0 : index
    %c0_303 = arith.constant 0 : index
    %c3_304 = arith.constant 3 : index
    %c1_305 = arith.constant 1 : index
    %c0_306 = arith.constant 0 : index
    %c8_307 = arith.constant 8 : index
    %175 = vector.load %arg2[%c0_302, %c0_303, %c3_304, %c1_305, %c0_306, %c8_307] : memref<1x1x4x2x16x72xf32, #tpu.memory_space<vmem>>, vector<1x1x1x1x16x64xf32>
    %176 = vector.shape_cast %175 : vector<1x1x1x1x16x64xf32> to vector<16x64xf32>
    %c3_308 = arith.constant 3 : index
    %c128_309 = arith.constant 128 : index
    %c0_310 = arith.constant 0 : index
    %177 = vector.load %arg6[%c3_308, %c128_309, %c0_310] : memref<4x144x64xf32, #tpu.memory_space<vmem>>, vector<1x16x64xf32>
    %178 = vector.shape_cast %177 : vector<1x16x64xf32> to vector<16x64xf32>
    %179 = vector.shape_cast %176 : vector<16x64xf32> to vector<1x16x64xf32>
    tpu.vector_store %arg6[%c3_308, %c128_309, %c0_310], %179 {strides = array<i32>} : memref<4x144x64xf32, #tpu.memory_space<vmem>>, vector<1x16x64xf32>,
    %c0_311 = arith.constant 0 : index
    %c0_312 = arith.constant 0 : index
    %180 = vector.load %arg3[%c0_311, %c0_312] : memref<16x144xf32, #tpu.memory_space<vmem>>, vector<16x144xf32>
    %c0_313 = arith.constant 0 : index
    %c0_314 = arith.constant 0 : index
    %c0_315 = arith.constant 0 : index
    %181 = vector.load %arg6[%c0_313, %c0_314, %c0_315] : memref<4x144x64xf32, #tpu.memory_space<vmem>>, vector<1x144x64xf32>
    %182 = vector.shape_cast %181 : vector<1x144x64xf32> to vector<144x64xf32>
    %cst = arith.constant dense<0.000000e+00> : vector<16x64xf32>
    %183 = tpu.matmul %180, %182, %cst {dimension_numbers = #tpu.dot_dimension_numbers<[1], [0], [0], [1], [0, 0, 1, 1], [], []>} : vector<16x144xf32>, vector<144x64xf32>, vector<16x64xf32> -> vector<16x64xf32>
    %c1_316 = arith.constant 1 : index
    %c0_317 = arith.constant 0 : index
    %c0_318 = arith.constant 0 : index
    %184 = vector.load %arg6[%c1_316, %c0_317, %c0_318] : memref<4x144x64xf32, #tpu.memory_space<vmem>>, vector<1x144x64xf32>
    %185 = vector.shape_cast %184 : vector<1x144x64xf32> to vector<144x64xf32>
    %cst_319 = arith.constant dense<0.000000e+00> : vector<16x64xf32>
    %186 = tpu.matmul %180, %185, %cst_319 {dimension_numbers = #tpu.dot_dimension_numbers<[1], [0], [0], [1], [0, 0, 1, 1], [], []>} : vector<16x144xf32>, vector<144x64xf32>, vector<16x64xf32> -> vector<16x64xf32>
    %187 = arith.maximumf %183, %186 : vector<16x64xf32>
    %c2_320 = arith.constant 2 : index
    %c0_321 = arith.constant 0 : index
    %c0_322 = arith.constant 0 : index
    %188 = vector.load %arg6[%c2_320, %c0_321, %c0_322] : memref<4x144x64xf32, #tpu.memory_space<vmem>>, vector<1x144x64xf32>
    %189 = vector.shape_cast %188 : vector<1x144x64xf32> to vector<144x64xf32>
    %cst_323 = arith.constant dense<0.000000e+00> : vector<16x64xf32>
    %190 = tpu.matmul %180, %189, %cst_323 {dimension_numbers = #tpu.dot_dimension_numbers<[1], [0], [0], [1], [0, 0, 1, 1], [], []>} : vector<16x144xf32>, vector<144x64xf32>, vector<16x64xf32> -> vector<16x64xf32>
    %191 = arith.maximumf %187, %190 : vector<16x64xf32>
    %c3_324 = arith.constant 3 : index
    %c0_325 = arith.constant 0 : index
    %c0_326 = arith.constant 0 : index
    %192 = vector.load %arg6[%c3_324, %c0_325, %c0_326] : memref<4x144x64xf32, #tpu.memory_space<vmem>>, vector<1x144x64xf32>
    %193 = vector.shape_cast %192 : vector<1x144x64xf32> to vector<144x64xf32>
    %cst_327 = arith.constant dense<0.000000e+00> : vector<16x64xf32>
    %194 = tpu.matmul %180, %193, %cst_327 {dimension_numbers = #tpu.dot_dimension_numbers<[1], [0], [0], [1], [0, 0, 1, 1], [], []>} : vector<16x144xf32>, vector<144x64xf32>, vector<16x64xf32> -> vector<16x64xf32>
    %195 = arith.maximumf %191, %194 : vector<16x64xf32>
    %c0_328 = arith.constant 0 : index
    %c0_329 = arith.constant 0 : index
    %196 = vector.load %arg4[%c0_328, %c0_329] : memref<16x1xf32, #tpu.memory_space<vmem>>, vector<16x1xf32>
    %197 = vector.broadcast %196 : vector<16x1xf32> to vector<16x64xf32>
    %198 = arith.addf %195, %197 : vector<16x64xf32>
    %cst_330 = arith.constant 0.000000e+00 : f32
    %199 = vector.broadcast %cst_330 : f32 to vector<16x64xf32>
    %200 = arith.maximumf %198, %199 : vector<16x64xf32>
    %c0_331 = arith.constant 0 : index
    %c0_332 = arith.constant 0 : index
    %c0_333 = arith.constant 0 : index
    %c0_334 = arith.constant 0 : index
    %201 = vector.load %arg5[%c0_331, %c0_332, %c0_333, %c0_334] : memref<1x1x16x64xf32, #tpu.memory_space<vmem>>, vector<1x1x16x64xf32>
    %202 = vector.shape_cast %201 : vector<1x1x16x64xf32> to vector<16x64xf32>
    %203 = vector.shape_cast %200 : vector<16x64xf32> to vector<1x1x16x64xf32>
    tpu.vector_store %arg5[%c0_331, %c0_332, %c0_333, %c0_334], %203 {strides = array<i32>} : memref<1x1x16x64xf32, #tpu.memory_space<vmem>>, vector<1x1x16x64xf32>,
    return
  }
  func.func @transform_0(%arg0: i32, %arg1: i32) -> (i32, i32, i32, i32, i32, i32) {
    %c0_i32 = arith.constant 0 : i32
    %c0_i32_0 = arith.constant 0 : i32
    %c0_i32_1 = arith.constant 0 : i32
    %c0_i32_2 = arith.constant 0 : i32
    %c0_i32_3 = arith.constant 0 : i32
    return %arg0, %arg1, %c0_i32, %c0_i32_0, %c0_i32_1, %c0_i32_2 : i32, i32, i32, i32, i32, i32
  }
  func.func @transform_1(%arg0: i32, %arg1: i32) -> (i32, i32) {
    %c0_i32 = arith.constant 0 : i32
    %c0_i32_0 = arith.constant 0 : i32
    %c0_i32_1 = arith.constant 0 : i32
    return %c0_i32, %c0_i32_0 : i32, i32
  }
  func.func @transform_2(%arg0: i32, %arg1: i32) -> (i32, i32) {
    %c0_i32 = arith.constant 0 : i32
    %c0_i32_0 = arith.constant 0 : i32
    %c0_i32_1 = arith.constant 0 : i32
    return %c0_i32, %c0_i32_0 : i32, i32
  }
  func.func @transform_3(%arg0: i32, %arg1: i32) -> (i32, i32, i32, i32) {
    %c0_i32 = arith.constant 0 : i32
    %c0_i32_0 = arith.constant 0 : i32
    %c0_i32_1 = arith.constant 0 : i32
    return %arg0, %arg1, %c0_i32, %c0_i32_0 : i32, i32, i32, i32
  }
}

</mosaic_0001>

<llo_original>
// kernel: tpu_custom_call.1
$region0: #{tpu_custom_call.1}
  #allocation0 [shape = 'u32[]', space=smem, size = 0x4, offset = 0x4, fixed_abs, tag = 'smem constant byte address 0x4 - core index']
  #allocation1 [shape = 'u32[144,128]{1,0:T(1,128)}', space=vmem, size = 0x12000, scoped, tag = 'internal scratch']
  #allocation2 [shape = 'f32[4,144,64]{2,1,0:T(8,128)}', space=vmem, size = 0x48000, scoped, tag = 'scratch operand']
  %s0 = inlined_call_operand.hbm [shape: f32[2,1,4,2,16,72], index: 0, kind: input, shape index: {}]
  %s1 = inlined_call_operand.hbm [shape: f32[16,144], index: 1, kind: input, shape index: {}]
  %s2 = inlined_call_operand.vmem [shape: f32[16,1], index: 2, kind: input, shape index: {}]
  %s3 = inlined_call_operand.hbm [shape: f32[2,1,16,64], index: 3, kind: output, shape index: {}]
  %s4 = sld [smem:[#allocation0]]
  $region53: #{tpu_custom_call.1} parent=0
    _
  %s6 = ssub.s32 1, %s4
  %s7 = scalar_select 0, %s6, %s4
  $region1: #{tpu_custom_call.1} parent=0
    #allocation3 [shape = 'u8[131072]{0}', space=vmem, size = 0x20000, scoped, tag = 'input window, operand 0']
    #allocation4 [shape = 's32[2]{0}', space=sflag, size = 0x8, scoped, tag = 'scoped memory for tpu_custom_call.1']
    #allocation5 [shape = 's32[2]{0}', space=sflag, size = 0x8, scoped, tag = 'scoped memory for tpu_custom_call.1']
    #allocation6 [shape = 'u8[16384]{0}', space=vmem, size = 0x4000, scoped, tag = 'input window, operand 1, single buffered']
    #allocation7 [shape = 's32[1]{0}', space=sflag, size = 0x4, scoped, tag = 'scoped memory for tpu_custom_call.1']
    #allocation8 [shape = 'u8[16384]{0}', space=vmem, size = 0x4000, scoped, tag = 'output window, operand 0']
    %8 = vsyncpa [#allocation4], 0
    %s9 = scalar_lea.sflag [#allocation4], 1
    %10 = vsyncpa %s9, 0
    %11 = vsyncpa [#allocation7], 0
    %12 = vsyncpa [#allocation5], 0
    %s13 = scalar_lea.sflag [#allocation5], 1
    %14 = vsyncpa %s13, 0
    loop: start=0, step=1, limit=4
    $region2: #{tpu_custom_call.1} parent=1 // loop_pre_header
      _
    $region3: #{tpu_custom_call.1} parent=1 // loop_header
      %s16 = sphi 0, %s20
      %p17 = scmp.ge.s32.totalorder %s16, 4
      %s23 = sphi 0, %s35
      %s24 = sphi 0, %s31
      %s25 = sphi 0, %s23
      %s26 = sphi 0, %s24
      %s27 = sphi 0, %s25
      %s28 = sphi 0, %s26
      %s40 = sphi 0, %s42
      %s43 = sphi 0, %s40
      %s44 = sphi 0, %s43
      %s60 = sphi 0, %s44
      %s64 = sphi 0, %s64
      %s66 = sphi 0, %s64
      %s67 = sphi 0, %s66
      %s81 = sphi 0, %s67
      %s85 = sphi 0, %s85
      %s87 = sphi 0, %s85
      %s88 = sphi 0, %s87
      %s102 = sphi 0, %s88
      %s110 = sphi 0, %s112
      %s113 = sphi 0, %s110
      %s114 = sphi 0, %s113
      %s130 = sphi 0, %s114
    $region4: #{tpu_custom_call.1} parent=1 // loop_header_branch
      %19 = sbr.rel (%p17) target = $region8
    $region5: #{tpu_custom_call.1} parent=1 // loop_body
      %s21 = ssub.s32 %s16, 1
      %s22 = ssub.s32 %s16, 2
      %s29 = sadd.s32 1, %s24
      %p30 = scmp.ge.s32.totalorder %s29, 1
      %s31 = scalar_select %p30, 0, %s29
      %s32 = sadd.s32 1, %s23
      %s33 = scalar_select %p30, %s32, %s23
      %p34 = scmp.ge.s32.totalorder %s33, 2
      %s35 = scalar_select %p34, 0, %s33
      %s36 = ssub.s32 %s23, %s35
      %s37 = ssub.s32 %s24, %s31
      %s38 = sor.u32 %s36, %s37
      %p39 = scmp.eq.s32.totalorder %s38, 0
      %s41 = sadd.s32 %s40, 1
      %s42 = scalar_select %p39, %s40, %s41
      %p45 = pneg %p39
      %p46 = scmp.eq.s32.totalorder %s16, 1
      %p47 = por %p45, %p46
      %p48 = scmp.ne.s32.totalorder %s40, %s43
      %p49 = scmp.eq.s32.totalorder %s16, 0
      %p50 = por %p48, %p49
      %p51 = scmp.ne.s32.totalorder %s40, %s43
      %p52 = scmp.eq.s32.totalorder %s21, 1
      %p53 = por %p51, %p52
      %p54 = scmp.ne.s32.totalorder %s43, %s44
      %p55 = scmp.eq.s32.totalorder %s21, 0
      %p56 = por %p54, %p55
      %p57 = scmp.ne.s32.totalorder %s43, %s44
      %p58 = scmp.eq.s32.totalorder %s22, 1
      %p59 = por %p57, %p58
      %p61 = scmp.ne.s32.totalorder %s44, %s60
      %p62 = scmp.eq.s32.totalorder %s22, 0
      %p63 = por %p61, %p62
      %s65 = sadd.s32 %s64, 1
      %p68 = scmp.eq.s32.totalorder %s16, 1
      %p69 = scmp.ne.s32.totalorder %s64, %s66
      %p70 = scmp.eq.s32.totalorder %s16, 0
      %p71 = por %p69, %p70
      %p72 = scmp.ne.s32.totalorder %s64, %s66
      %p73 = scmp.eq.s32.totalorder %s21, 1
      %p74 = por %p72, %p73
      %p75 = scmp.ne.s32.totalorder %s66, %s67
      %p76 = scmp.eq.s32.totalorder %s21, 0
      %p77 = por %p75, %p76
      %p78 = scmp.ne.s32.totalorder %s66, %s67
      %p79 = scmp.eq.s32.totalorder %s22, 1
      %p80 = por %p78, %p79
      %p82 = scmp.ne.s32.totalorder %s67, %s81
      %p83 = scmp.eq.s32.totalorder %s22, 0
      %p84 = por %p82, %p83
      %s86 = sadd.s32 %s85, 1
      %p89 = scmp.eq.s32.totalorder %s16, 1
      %p90 = scmp.ne.s32.totalorder %s85, %s87
      %p91 = scmp.eq.s32.totalorder %s16, 0
      %p92 = por %p90, %p91
      %p93 = scmp.ne.s32.totalorder %s85, %s87
      %p94 = scmp.eq.s32.totalorder %s21, 1
      %p95 = por %p93, %p94
      %p96 = scmp.ne.s32.totalorder %s87, %s88
      %p97 = scmp.eq.s32.totalorder %s21, 0
      %p98 = por %p96, %p97
      %p99 = scmp.ne.s32.totalorder %s87, %s88
      %p100 = scmp.eq.s32.totalorder %s22, 1
      %p101 = por %p99, %p100
      %p103 = scmp.ne.s32.totalorder %s88, %s102
      %p104 = scmp.eq.s32.totalorder %s22, 0
      %p105 = por %p103, %p104
      %s106 = ssub.s32 %s23, %s35
      %s107 = ssub.s32 %s24, %s31
      %s108 = sor.u32 %s106, %s107
      %p109 = scmp.eq.s32.totalorder %s108, 0
      %s111 = sadd.s32 %s110, 1
      %s112 = scalar_select %p109, %s110, %s111
      %p115 = pneg %p109
      %p116 = scmp.eq.s32.totalorder %s16, 1
      %p117 = por %p115, %p116
      %p118 = scmp.ne.s32.totalorder %s110, %s113
      %p119 = scmp.eq.s32.totalorder %s16, 0
      %p120 = por %p118, %p119
      %p121 = scmp.ne.s32.totalorder %s110, %s113
      %p122 = scmp.eq.s32.totalorder %s21, 1
      %p123 = por %p121, %p122
      %p124 = scmp.ne.s32.totalorder %s113, %s114
      %p125 = scmp.eq.s32.totalorder %s21, 0
      %p126 = por %p124, %p125
      %p127 = scmp.ne.s32.totalorder %s113, %s114
      %p128 = scmp.eq.s32.totalorder %s22, 1
      %p129 = por %p127, %p128
      %p131 = scmp.ne.s32.totalorder %s114, %s130
      %p132 = scmp.eq.s32.totalorder %s22, 0
      %p133 = por %p131, %p132
      %p134 = scmp.le.s32.totalorder 1, %s16
      %p135 = scmp.lt.s32.totalorder %s16, 3
      %p136 = pnand %p134, %p135
      %p137 = pneg %p136
      // Predicated region
      $region9: #{tpu_custom_call.1} parent=5 // pred_check
        _
      $region10: #{tpu_custom_call.1} parent=5 // pred_check_branch
        %139 = sbr.rel (%p136) target = $region12
      $region11: #{tpu_custom_call.1} parent=5 // pred_region
        %s140 = ssub.s32 %s16, 1
        // Predicated region
        $region13: #{tpu_custom_call.1} parent=11 // pred_check
          %p141 = pneg %p77
        $region14: #{tpu_custom_call.1} parent=11 // pred_check_branch
          %143 = sbr.rel (%p141) target = $region16
        $region15: #{tpu_custom_call.1} parent=11 // pred_region
          %s145 = ssub.s32 512, 512
          %146 = vsyncadd [#allocation7], %s145
          %s147 = sshll.u32 [#allocation6], 4
          %s148 = int_to_ptr.vmem [resolvable:$true] %s147
          %153 = dma.hbm_to_vmem [thread:$0]  %s1, 512, %s148, [#allocation7], 256, 256, 16
        $region16: #{tpu_custom_call.1} parent=11 // pred_fallthru
          _
        // Predicated region
        $region17: #{tpu_custom_call.1} parent=11 // pred_check
          %p154 = pneg %p98
        $region18: #{tpu_custom_call.1} parent=11 // pred_check_branch
          %156 = sbr.rel (%p154) target = $region20
        $region19: #{tpu_custom_call.1} parent=11 // pred_region
          _
        $region20: #{tpu_custom_call.1} parent=11 // pred_fallthru
          _
      $region12: #{tpu_custom_call.1} parent=5 // pred_fallthru
        _
      %p157 = scmp.lt.s32.totalorder %s16, 2
      // Predicated region
      $region21: #{tpu_custom_call.1} parent=5 // pred_check
        %p158 = pneg %p157
      $region22: #{tpu_custom_call.1} parent=5 // pred_check_branch
        %160 = sbr.rel (%p158) target = $region24
      $region23: #{tpu_custom_call.1} parent=5 // pred_region
        // Predicated region
        $region25: #{tpu_custom_call.1} parent=23 // pred_check
          %p161 = pneg %p50
        $region26: #{tpu_custom_call.1} parent=23 // pred_check_branch
          %163 = sbr.rel (%p161) target = $region28
        $region27: #{tpu_custom_call.1} parent=23 // pred_region
          %s164 = sand.u32 %s40, 1
          %s165 = scalar_lea.sflag [#allocation4], %s164
          %s166 = sand.u32 %s40, 1
          %s167 = smul.addr %s166, 128
          %s168 = scalar_lea.vmem [#allocation3], %s167
          %s170 = ssub.s32 2048, 2048
          %171 = vsyncadd %s165, %s170
          %s172 = smul.addr %s24, 16
          %s173 = smul.addr %s23, 16
          %s174 = sadd.s32 %s172, %s173
          %s175 = smul.addr %s174, 128
          %s176 = scalar_lea.hbm %s0, %s175
          %s177 = sshll.u32 %s168, 4
          %s178 = int_to_ptr.vmem [resolvable:$true] %s177
          %183 = dma.hbm_to_vmem [thread:$0]  %s176, 2048, %s178, %s165, 128, 128, 8
        $region28: #{tpu_custom_call.1} parent=23 // pred_fallthru
          _
      $region24: #{tpu_custom_call.1} parent=5 // pred_fallthru
        _
      %p184 = scmp.le.s32.totalorder 1, %s16
      %p185 = scmp.lt.s32.totalorder %s16, 3
      %p186 = pnand %p184, %p185
      %p187 = pneg %p186
      // Predicated region
      $region29: #{tpu_custom_call.1} parent=5 // pred_check
        _
      $region30: #{tpu_custom_call.1} parent=5 // pred_check_branch
        %189 = sbr.rel (%p186) target = $region32
      $region31: #{tpu_custom_call.1} parent=5 // pred_region
        %s190 = ssub.s32 %s16, 1
        %s191 = sand.u32 %s43, 1
        %s192 = scalar_lea.sflag [#allocation4], %s191
        %s193 = sand.u32 %s43, 1
        %s194 = smul.addr %s193, 128
        %s195 = scalar_lea.vmem [#allocation3], %s194
        // Predicated region
        $region33: #{tpu_custom_call.1} parent=31 // pred_check
          %p196 = pneg %p56
        $region34: #{tpu_custom_call.1} parent=31 // pred_check_branch
          %198 = sbr.rel (%p196) target = $region36
        $region35: #{tpu_custom_call.1} parent=31 // pred_region
          %199 = dma.done %s192, 2048
        $region36: #{tpu_custom_call.1} parent=31 // pred_fallthru
          _
        // Predicated region
        $region37: #{tpu_custom_call.1} parent=31 // pred_check
          %p200 = pneg %p77
        $region38: #{tpu_custom_call.1} parent=31 // pred_check_branch
          %202 = sbr.rel (%p200) target = $region40
        $region39: #{tpu_custom_call.1} parent=31 // pred_region
          %203 = dma.done [#allocation7], 512
        $region40: #{tpu_custom_call.1} parent=31 // pred_fallthru
          _
        %s204 = sand.u32 %s43, 1
        %s205 = scalar_lea.sflag [#allocation4], %s204
        %s206 = sand.u32 %s43, 1
        %s207 = smul.addr %s206, 128
        %s208 = scalar_lea.vmem [#allocation3], %s207
        %p209 = pneg %p56
        %p210 = pneg %p53
        %p211 = pneg %p77
        %p212 = pneg %p74
        %p213 = pneg %p98
        %p214 = pneg %p95
        %p215 = pneg %p126
        %p216 = pneg %p123
        %s217 = sand.u32 %s113, 1
        %s218 = scalar_lea.sflag [#allocation5], %s217
        %s219 = sand.u32 %s113, 1
        %s220 = smul.addr %s219, 16
        %s221 = scalar_lea.vmem [#allocation8], %s220
        %v222 = vld [vmem:[%s195] sm:$0xff]
        %v223 = vld [vmem:[%s195 + $0x8] sm:$0xff]
        %vm224 = vcmask 523264
        %225 = vst.msk [vmem:[#allocation2] sm:$0xff] %vm224, %v222
        %226 = vst.msk [vmem:[#allocation2 + $0x8] sm:$0xff] %vm224, %v223
        %s227 = scalar_lea.vmem %s195, 32 [#allocation3]
        %v228 = vld [vmem:[%s227] sm:$0xff]
        %v229 = vld [vmem:[%s227 + $0x8] sm:$0xff]
        %230 = vst.msk [vmem:[#allocation2 + $0x10] sm:$0xff] %vm224, %v228
        %231 = vst.msk [vmem:[#allocation2 + $0x18] sm:$0xff] %vm224, %v229
        %s232 = scalar_lea.vmem %s195, 64 [#allocation3]
        %v233 = vld [vmem:[%s232] sm:$0xff]
        %v234 = vld [vmem:[%s232 + $0x8] sm:$0xff]
        %235 = vst.msk [vmem:[#allocation2 + $0x20] sm:$0xff] %vm224, %v233
        %236 = vst.msk [vmem:[#allocation2 + $0x28] sm:$0xff] %vm224, %v234
        %s237 = scalar_lea.vmem %s195, 16 [#allocation3]
        %v238 = vld [vmem:[%s237] sm:$0xff]
        %v239 = vld [vmem:[%s237 + $0x8] sm:$0xff]
        %240 = vst.msk [vmem:[#allocation2 + $0x30] sm:$0xff] %vm224, %v238
        %241 = vst.msk [vmem:[#allocation2 + $0x38] sm:$0xff] %vm224, %v239
        %s242 = scalar_lea.vmem %s195, 48 [#allocation3]
        %v243 = vld [vmem:[%s242] sm:$0xff]
        %v244 = vld [vmem:[%s242 + $0x8] sm:$0xff]
        %245 = vst.msk [vmem:[#allocation2 + $0x40] sm:$0xff] %vm224, %v243
        %246 = vst.msk [vmem:[#allocation2 + $0x48] sm:$0xff] %vm224, %v244
        %s247 = scalar_lea.vmem %s195, 80 [#allocation3]
        %v248 = vld [vmem:[%s247] sm:$0xff]
        %v249 = vld [vmem:[%s247 + $0x8] sm:$0xff]
        %250 = vst.msk [vmem:[#allocation2 + $0x50] sm:$0xff] %vm224, %v248
        %251 = vst.msk [vmem:[#allocation2 + $0x58] sm:$0xff] %vm224, %v249
        %v252 = vld [vmem:[%s195] sm:$0xff]
        %v253 = vld [vmem:[%s195 + $0x8] sm:$0xff]
        %256 = vrot.lane.b32.xlu0 %v252, 120
        %v257 = vpop.permute.xlu0 %256
        %258 = vrot.lane.b32.xlu0 %v253, 120
        %v259 = vpop.permute.xlu0 %258
        %262 = vst.msk [vmem:[#allocation2 + $0x60] sm:$0xff] %vm224, %v257
        %263 = vst.msk [vmem:[#allocation2 + $0x68] sm:$0xff] %vm224, %v259
        %v264 = vld [vmem:[%s227] sm:$0xff]
        %v265 = vld [vmem:[%s227 + $0x8] sm:$0xff]
        %268 = vrot.lane.b32.xlu0 %v264, 120
        %v269 = vpop.permute.xlu0 %268
        %270 = vrot.lane.b32.xlu0 %v265, 120
        %v271 = vpop.permute.xlu0 %270
        %274 = vst.msk [vmem:[#allocation2 + $0x70] sm:$0xff] %vm224, %v269
        %275 = vst.msk [vmem:[#allocation2 + $0x78] sm:$0xff] %vm224, %v271
        %v276 = vld [vmem:[%s232] sm:$0xff]
        %v277 = vld [vmem:[%s232 + $0x8] sm:$0xff]
        %280 = vrot.lane.b32.xlu0 %v276, 120
        %v281 = vpop.permute.xlu0 %280
        %282 = vrot.lane.b32.xlu0 %v277, 120
        %v283 = vpop.permute.xlu0 %282
        %286 = vst.msk [vmem:[#allocation2 + $0x80] sm:$0xff] %vm224, %v281
        %287 = vst.msk [vmem:[#allocation2 + $0x88] sm:$0xff] %vm224, %v283
        %v288 = vld [vmem:[%s227] sm:$0xff]
        %v289 = vld [vmem:[%s227 + $0x8] sm:$0xff]
        %s290 = scalar_lea.vmem [#allocation2], 144
        %291 = vst.msk [vmem:[%s290] sm:$0xff] %vm224, %v288
        %292 = vst.msk [vmem:[%s290 + $0x8] sm:$0xff] %vm224, %v289
        %v293 = vld [vmem:[%s232] sm:$0xff]
        %v294 = vld [vmem:[%s232 + $0x8] sm:$0xff]
        %295 = vst.msk [vmem:[%s290 + $0x10] sm:$0xff] %vm224, %v293
        %296 = vst.msk [vmem:[%s290 + $0x18] sm:$0xff] %vm224, %v294
        %s297 = scalar_lea.vmem %s195, 96 [#allocation3]
        %v298 = vld [vmem:[%s297] sm:$0xff]
        %v299 = vld [vmem:[%s297 + $0x8] sm:$0xff]
        %300 = vst.msk [vmem:[%s290 + $0x20] sm:$0xff] %vm224, %v298
        %301 = vst.msk [vmem:[%s290 + $0x28] sm:$0xff] %vm224, %v299
        %v302 = vld [vmem:[%s242] sm:$0xff]
        %v303 = vld [vmem:[%s242 + $0x8] sm:$0xff]
        %304 = vst.msk [vmem:[%s290 + $0x30] sm:$0xff] %vm224, %v302
        %305 = vst.msk [vmem:[%s290 + $0x38] sm:$0xff] %vm224, %v303
        %v306 = vld [vmem:[%s247] sm:$0xff]
        %v307 = vld [vmem:[%s247 + $0x8] sm:$0xff]
        %308 = vst.msk [vmem:[%s290 + $0x40] sm:$0xff] %vm224, %v306
        %309 = vst.msk [vmem:[%s290 + $0x48] sm:$0xff] %vm224, %v307
        %s310 = scalar_lea.vmem %s195, 112 [#allocation3]
        %v311 = vld [vmem:[%s310] sm:$0xff]
        %v312 = vld [vmem:[%s310 + $0x8] sm:$0xff]
        %313 = vst.msk [vmem:[%s290 + $0x50] sm:$0xff] %vm224, %v311
        %314 = vst.msk [vmem:[%s290 + $0x58] sm:$0xff] %vm224, %v312
        %v315 = vld [vmem:[%s227] sm:$0xff]
        %v316 = vld [vmem:[%s227 + $0x8] sm:$0xff]
        %319 = vrot.lane.b32.xlu0 %v315, 120
        %v320 = vpop.permute.xlu0 %319
        %321 = vrot.lane.b32.xlu0 %v316, 120
        %v322 = vpop.permute.xlu0 %321
        %325 = vst.msk [vmem:[%s290 + $0x60] sm:$0xff] %vm224, %v320
        %326 = vst.msk [vmem:[%s290 + $0x68] sm:$0xff] %vm224, %v322
        %v327 = vld [vmem:[%s232] sm:$0xff]
        %v328 = vld [vmem:[%s232 + $0x8] sm:$0xff]
        %331 = vrot.lane.b32.xlu0 %v327, 120
        %v332 = vpop.permute.xlu0 %331
        %333 = vrot.lane.b32.xlu0 %v328, 120
        %v334 = vpop.permute.xlu0 %333
        %337 = vst.msk [vmem:[%s290 + $0x70] sm:$0xff] %vm224, %v332
        %338 = vst.msk [vmem:[%s290 + $0x78] sm:$0xff] %vm224, %v334
        %v339 = vld [vmem:[%s297] sm:$0xff]
        %v340 = vld [vmem:[%s297 + $0x8] sm:$0xff]
        %343 = vrot.lane.b32.xlu0 %v339, 120
        %v344 = vpop.permute.xlu0 %343
        %345 = vrot.lane.b32.xlu0 %v340, 120
        %v346 = vpop.permute.xlu0 %345
        %349 = vst.msk [vmem:[%s290 + $0x80] sm:$0xff] %vm224, %v344
        %350 = vst.msk [vmem:[%s290 + $0x88] sm:$0xff] %vm224, %v346
        %v351 = vld [vmem:[%s237] sm:$0xff]
        %v352 = vld [vmem:[%s237 + $0x8] sm:$0xff]
        %s353 = scalar_lea.vmem [#allocation2], 288
        %354 = vst.msk [vmem:[%s353] sm:$0xff] %vm224, %v351
        %355 = vst.msk [vmem:[%s353 + $0x8] sm:$0xff] %vm224, %v352
        %v356 = vld [vmem:[%s242] sm:$0xff]
        %v357 = vld [vmem:[%s242 + $0x8] sm:$0xff]
        %358 = vst.msk [vmem:[%s353 + $0x10] sm:$0xff] %vm224, %v356
        %359 = vst.msk [vmem:[%s353 + $0x18] sm:$0xff] %vm224, %v357
        %v360 = vld [vmem:[%s247] sm:$0xff]
        %v361 = vld [vmem:[%s247 + $0x8] sm:$0xff]
        %362 = vst.msk [vmem:[%s353 + $0x20] sm:$0xff] %vm224, %v360
        %363 = vst.msk [vmem:[%s353 + $0x28] sm:$0xff] %vm224, %v361
        %v364 = vld [vmem:[%s195] sm:$0xff]
        %v365 = vld [vmem:[%s195 + $0x8] sm:$0xff]
        %368 = vrot.lane.b32.xlu0 %v364, 120
        %v369 = vpop.permute.xlu0 %368
        %370 = vrot.lane.b32.xlu0 %v365, 120
        %v371 = vpop.permute.xlu0 %370
        %374 = vst.msk [vmem:[%s353 + $0x30] sm:$0xff] %vm224, %v369
        %375 = vst.msk [vmem:[%s353 + $0x38] sm:$0xff] %vm224, %v371
        %v376 = vld [vmem:[%s227] sm:$0xff]
        %v377 = vld [vmem:[%s227 + $0x8] sm:$0xff]
        %380 = vrot.lane.b32.xlu0 %v376, 120
        %v381 = vpop.permute.xlu0 %380
        %382 = vrot.lane.b32.xlu0 %v377, 120
        %v383 = vpop.permute.xlu0 %382
        %386 = vst.msk [vmem:[%s353 + $0x40] sm:$0xff] %vm224, %v381
        %387 = vst.msk [vmem:[%s353 + $0x48] sm:$0xff] %vm224, %v383
        %v388 = vld [vmem:[%s232] sm:$0xff]
        %v389 = vld [vmem:[%s232 + $0x8] sm:$0xff]
        %392 = vrot.lane.b32.xlu0 %v388, 120
        %v393 = vpop.permute.xlu0 %392
        %394 = vrot.lane.b32.xlu0 %v389, 120
        %v395 = vpop.permute.xlu0 %394
        %398 = vst.msk [vmem:[%s353 + $0x50] sm:$0xff] %vm224, %v393
        %399 = vst.msk [vmem:[%s353 + $0x58] sm:$0xff] %vm224, %v395
        %v400 = vld [vmem:[%s237] sm:$0xff]
        %v401 = vld [vmem:[%s237 + $0x8] sm:$0xff]
        %404 = vrot.lane.b32.xlu0 %v400, 120
        %v405 = vpop.permute.xlu0 %404
        %406 = vrot.lane.b32.xlu0 %v401, 120
        %v407 = vpop.permute.xlu0 %406
        %410 = vst.msk [vmem:[%s353 + $0x60] sm:$0xff] %vm224, %v405
        %411 = vst.msk [vmem:[%s353 + $0x68] sm:$0xff] %vm224, %v407
        %v412 = vld [vmem:[%s242] sm:$0xff]
        %v413 = vld [vmem:[%s242 + $0x8] sm:$0xff]
        %416 = vrot.lane.b32.xlu0 %v412, 120
        %v417 = vpop.permute.xlu0 %416
        %418 = vrot.lane.b32.xlu0 %v413, 120
        %v419 = vpop.permute.xlu0 %418
        %422 = vst.msk [vmem:[%s353 + $0x70] sm:$0xff] %vm224, %v417
        %423 = vst.msk [vmem:[%s353 + $0x78] sm:$0xff] %vm224, %v419
        %v424 = vld [vmem:[%s247] sm:$0xff]
        %v425 = vld [vmem:[%s247 + $0x8] sm:$0xff]
        %428 = vrot.lane.b32.xlu0 %v424, 120
        %v429 = vpop.permute.xlu0 %428
        %430 = vrot.lane.b32.xlu0 %v425, 120
        %v431 = vpop.permute.xlu0 %430
        %434 = vst.msk [vmem:[%s353 + $0x80] sm:$0xff] %vm224, %v429
        %435 = vst.msk [vmem:[%s353 + $0x88] sm:$0xff] %vm224, %v431
        %v436 = vld [vmem:[%s242] sm:$0xff]
        %v437 = vld [vmem:[%s242 + $0x8] sm:$0xff]
        %s438 = scalar_lea.vmem [#allocation2], 432
        %439 = vst.msk [vmem:[%s438] sm:$0xff] %vm224, %v436
        %440 = vst.msk [vmem:[%s438 + $0x8] sm:$0xff] %vm224, %v437
        %v441 = vld [vmem:[%s247] sm:$0xff]
        %v442 = vld [vmem:[%s247 + $0x8] sm:$0xff]
        %443 = vst.msk [vmem:[%s438 + $0x10] sm:$0xff] %vm224, %v441
        %444 = vst.msk [vmem:[%s438 + $0x18] sm:$0xff] %vm224, %v442
        %v445 = vld [vmem:[%s310] sm:$0xff]
        %v446 = vld [vmem:[%s310 + $0x8] sm:$0xff]
        %447 = vst.msk [vmem:[%s438 + $0x20] sm:$0xff] %vm224, %v445
        %448 = vst.msk [vmem:[%s438 + $0x28] sm:$0xff] %vm224, %v446
        %v449 = vld [vmem:[%s227] sm:$0xff]
        %v450 = vld [vmem:[%s227 + $0x8] sm:$0xff]
        %453 = vrot.lane.b32.xlu0 %v449, 120
        %v454 = vpop.permute.xlu0 %453
        %455 = vrot.lane.b32.xlu0 %v450, 120
        %v456 = vpop.permute.xlu0 %455
        %459 = vst.msk [vmem:[%s438 + $0x30] sm:$0xff] %vm224, %v454
        %460 = vst.msk [vmem:[%s438 + $0x38] sm:$0xff] %vm224, %v456
        %v461 = vld [vmem:[%s232] sm:$0xff]
        %v462 = vld [vmem:[%s232 + $0x8] sm:$0xff]
        %465 = vrot.lane.b32.xlu0 %v461, 120
        %v466 = vpop.permute.xlu0 %465
        %467 = vrot.lane.b32.xlu0 %v462, 120
        %v468 = vpop.permute.xlu0 %467
        %471 = vst.msk [vmem:[%s438 + $0x40] sm:$0xff] %vm224, %v466
        %472 = vst.msk [vmem:[%s438 + $0x48] sm:$0xff] %vm224, %v468
        %v473 = vld [vmem:[%s297] sm:$0xff]
        %v474 = vld [vmem:[%s297 + $0x8] sm:$0xff]
        %477 = vrot.lane.b32.xlu0 %v473, 120
        %v478 = vpop.permute.xlu0 %477
        %479 = vrot.lane.b32.xlu0 %v474, 120
        %v480 = vpop.permute.xlu0 %479
        %483 = vst.msk [vmem:[%s438 + $0x50] sm:$0xff] %vm224, %v478
        %484 = vst.msk [vmem:[%s438 + $0x58] sm:$0xff] %vm224, %v480
        %v485 = vld [vmem:[%s242] sm:$0xff]
        %v486 = vld [vmem:[%s242 + $0x8] sm:$0xff]
        %489 = vrot.lane.b32.xlu0 %v485, 120
        %v490 = vpop.permute.xlu0 %489
        %491 = vrot.lane.b32.xlu0 %v486, 120
        %v492 = vpop.permute.xlu0 %491
        %495 = vst.msk [vmem:[%s438 + $0x60] sm:$0xff] %vm224, %v490
        %496 = vst.msk [vmem:[%s438 + $0x68] sm:$0xff] %vm224, %v492
        %v497 = vld [vmem:[%s247] sm:$0xff]
        %v498 = vld [vmem:[%s247 + $0x8] sm:$0xff]
        %501 = vrot.lane.b32.xlu0 %v497, 120
        %v502 = vpop.permute.xlu0 %501
        %503 = vrot.lane.b32.xlu0 %v498, 120
        %v504 = vpop.permute.xlu0 %503
        %507 = vst.msk [vmem:[%s438 + $0x70] sm:$0xff] %vm224, %v502
        %508 = vst.msk [vmem:[%s438 + $0x78] sm:$0xff] %vm224, %v504
        %v509 = vld [vmem:[%s310] sm:$0xff]
        %v510 = vld [vmem:[%s310 + $0x8] sm:$0xff]
        %513 = vrot.lane.b32.xlu0 %v509, 120
        %v514 = vpop.permute.xlu0 %513
        %515 = vrot.lane.b32.xlu0 %v510, 120
        %v516 = vpop.permute.xlu0 %515
        %519 = vst.msk [vmem:[%s438 + $0x80] sm:$0xff] %vm224, %v514
        %520 = vst.msk [vmem:[%s438 + $0x88] sm:$0xff] %vm224, %v516
        %v521 = vld [vmem:[#allocation6] sm:$0xff]
        %v522 = vld [vmem:[#allocation6 + $0x8] sm:$0xff]
        %v523 = vld [vmem:[#allocation6 + $0x10] sm:$0xff]
        %v524 = vld [vmem:[#allocation6 + $0x18] sm:$0xff]
        %v525 = vld [vmem:[#allocation2] sm:$0xff]
        %v526 = vld [vmem:[#allocation2 + $0x8] sm:$0xff]
        %v527 = vld [vmem:[#allocation2 + $0x10] sm:$0xff]
        %v528 = vld [vmem:[#allocation2 + $0x18] sm:$0xff]
        %v529 = vld [vmem:[#allocation2 + $0x20] sm:$0xff]
        %v530 = vld [vmem:[#allocation2 + $0x28] sm:$0xff]
        %v531 = vld [vmem:[#allocation2 + $0x30] sm:$0xff]
        %v532 = vld [vmem:[#allocation2 + $0x38] sm:$0xff]
        %v533 = vld [vmem:[#allocation2 + $0x40] sm:$0xff]
        %v534 = vld [vmem:[#allocation2 + $0x48] sm:$0xff]
        %v535 = vld [vmem:[#allocation2 + $0x50] sm:$0xff]
        %v536 = vld [vmem:[#allocation2 + $0x58] sm:$0xff]
        %v537 = vld [vmem:[#allocation2 + $0x60] sm:$0xff]
        %v538 = vld [vmem:[#allocation2 + $0x68] sm:$0xff]
        %v539 = vld [vmem:[#allocation2 + $0x70] sm:$0xff]
        %v540 = vld [vmem:[#allocation2 + $0x78] sm:$0xff]
        %v541 = vld [vmem:[#allocation2 + $0x80] sm:$0xff]
        %v542 = vld [vmem:[#allocation2 + $0x88] sm:$0xff]
        %vm543 = vcmask 130048
        %v545 = vsel %vm543, %v522, 0
        %v548 = vsel %vm543, %v524, 0
        %550 = vmatprep.subr.mxu0 0.0
        %551 = vmatpush1.msra.mxu0 %v525
        %552 = vmatprep.subr.mxu0 0.0
        %553 = vmatpush1.msra.mxu0 %v526
        %554 = vmatprep.subr.mxu0 0.0
        %555 = vmatpush1.msra.mxu0 %v527
        %556 = vmatprep.subr.mxu0 0.0
        %557 = vmatpush1.msra.mxu0 %v528
        %558 = vmatprep.subr.mxu0 0.0
        %559 = vmatpush1.msra.mxu0 %v529
        %560 = vmatprep.subr.mxu0 0.0
        %561 = vmatpush1.msra.mxu0 %v530
        %562 = vmatprep.subr.mxu0 0.0
        %563 = vmatpush1.msra.mxu0 %v531
        %564 = vmatprep.subr.mxu0 0.0
        %565 = vmatpush1.msra.mxu0 %v532
        %566 = vmatprep.subr.mxu0 0.0
        %567 = vmatpush1.msra.mxu0 %v533
        %568 = vmatprep.subr.mxu0 0.0
        %569 = vmatpush1.msra.mxu0 %v534
        %570 = vmatprep.subr.mxu0 0.0
        %571 = vmatpush1.msra.mxu0 %v535
        %572 = vmatprep.subr.mxu0 0.0
        %573 = vmatpush1.msra.mxu0 %v536
        %574 = vmatprep.subr.mxu0 0.0
        %575 = vmatpush1.msra.mxu0 %v537
        %576 = vmatprep.subr.mxu0 0.0
        %577 = vmatpush1.msra.mxu0 %v538
        %578 = vmatprep.subr.mxu0 0.0
        %579 = vmatpush1.msra.mxu0 %v539
        %580 = vmatprep.subr.mxu0 0.0
        %581 = vmatpush1.msra.mxu0 %v540
        %582 = vmatprep.subr.mxu0 0.0
        %583 = vmatpush1.msra.mxu0 %v541
        %584 = vmatprep.subr.mxu0 0.0
        %585 = vmatpush1.msra.mxu0 %v542
        %586 = vmatprep.subr.mxu0 0.0
        %587 = vmatpush1.msra.mxu0 0.0
        %588 = vmatprep.subr.mxu0 0.0
        %589 = vmatpush1.msra.mxu0 0.0
        %590 = vmatprep.subr.mxu0 0.0
        %591 = vmatpush1.msra.mxu0 0.0
        %592 = vmatprep.subr.mxu0 0.0
        %593 = vmatpush1.msra.mxu0 0.0
        %594 = vmatprep.subr.mxu0 0.0
        %595 = vmatpush1.msra.mxu0 0.0
        %596 = vmatprep.subr.mxu0 0.0
        %597 = vmatpush1.msra.mxu0 0.0
        %598 = vmatprep.subr.mxu0 0.0
        %599 = vmatpush1.msra.mxu0 0.0
        %600 = vmatprep.subr.mxu0 0.0
        %601 = vmatpush1.msra.mxu0 0.0
        %602 = vmatprep.subr.mxu0 0.0
        %603 = vmatpush1.msra.mxu0 0.0
        %604 = vmatprep.subr.mxu0 0.0
        %605 = vmatpush1.msra.mxu0 0.0
        %606 = vmatprep.subr.mxu0 0.0
        %607 = vmatpush1.msra.mxu0 0.0
        %608 = vmatprep.subr.mxu0 0.0
        %609 = vmatpush1.msra.mxu0 0.0
        %610 = vmatprep.subr.mxu0 0.0
        %611 = vmatpush1.msra.mxu0 0.0
        %612 = vmatprep.subr.mxu0 0.0
        %613 = vmatpush1.msra.mxu0 0.0
        %614 = vmatprep.mubr.f32.mxu0 %v545
        %615 = vmatmul.mubr.f32.gmra.mrb[0].mxu0 %v521
        %v616 = vpop.f32.mrb[0].mxu0
        %v617 = vadd.f32 0.0, %v616
        %v618 = vpop.f32.mrb[0].mxu0
        %619 = vmatprep.mubr.f32.mxu0 %v548
        %620 = vmatmul.mubr.f32.gmra.mrb[0].mxu0 %v523
        %v621 = vpop.f32.mrb[0].mxu0
        %v622 = vadd.f32 0.0, %v621
        %v623 = vpop.f32.mrb[0].mxu0
        %624 = vdwg.mxu0
        %v625 = vld [vmem:[%s290] sm:$0xff]
        %v626 = vld [vmem:[%s290 + $0x8] sm:$0xff]
        %v627 = vld [vmem:[%s290 + $0x10] sm:$0xff]
        %v628 = vld [vmem:[%s290 + $0x18] sm:$0xff]
        %v629 = vld [vmem:[%s290 + $0x20] sm:$0xff]
        %v630 = vld [vmem:[%s290 + $0x28] sm:$0xff]
        %v631 = vld [vmem:[%s290 + $0x30] sm:$0xff]
        %v632 = vld [vmem:[%s290 + $0x38] sm:$0xff]
        %v633 = vld [vmem:[%s290 + $0x40] sm:$0xff]
        %v634 = vld [vmem:[%s290 + $0x48] sm:$0xff]
        %v635 = vld [vmem:[%s290 + $0x50] sm:$0xff]
        %v636 = vld [vmem:[%s290 + $0x58] sm:$0xff]
        %v637 = vld [vmem:[%s290 + $0x60] sm:$0xff]
        %v638 = vld [vmem:[%s290 + $0x68] sm:$0xff]
        %v639 = vld [vmem:[%s290 + $0x70] sm:$0xff]
        %v640 = vld [vmem:[%s290 + $0x78] sm:$0xff]
        %v641 = vld [vmem:[%s290 + $0x80] sm:$0xff]
        %v642 = vld [vmem:[%s290 + $0x88] sm:$0xff]
        %643 = vmatprep.subr.mxu0 0.0
        %644 = vmatpush1.msra.mxu0 %v625
        %645 = vmatprep.subr.mxu0 0.0
        %646 = vmatpush1.msra.mxu0 %v626
        %647 = vmatprep.subr.mxu0 0.0
        %648 = vmatpush1.msra.mxu0 %v627
        %649 = vmatprep.subr.mxu0 0.0
        %650 = vmatpush1.msra.mxu0 %v628
        %651 = vmatprep.subr.mxu0 0.0
        %652 = vmatpush1.msra.mxu0 %v629
        %653 = vmatprep.subr.mxu0 0.0
        %654 = vmatpush1.msra.mxu0 %v630
        %655 = vmatprep.subr.mxu0 0.0
        %656 = vmatpush1.msra.mxu0 %v631
        %657 = vmatprep.subr.mxu0 0.0
        %658 = vmatpush1.msra.mxu0 %v632
        %659 = vmatprep.subr.mxu0 0.0
        %660 = vmatpush1.msra.mxu0 %v633
        %661 = vmatprep.subr.mxu0 0.0
        %662 = vmatpush1.msra.mxu0 %v634
        %663 = vmatprep.subr.mxu0 0.0
        %664 = vmatpush1.msra.mxu0 %v635
        %665 = vmatprep.subr.mxu0 0.0
        %666 = vmatpush1.msra.mxu0 %v636
        %667 = vmatprep.subr.mxu0 0.0
        %668 = vmatpush1.msra.mxu0 %v637
        %669 = vmatprep.subr.mxu0 0.0
        %670 = vmatpush1.msra.mxu0 %v638
        %671 = vmatprep.subr.mxu0 0.0
        %672 = vmatpush1.msra.mxu0 %v639
        %673 = vmatprep.subr.mxu0 0.0
        %674 = vmatpush1.msra.mxu0 %v640
        %675 = vmatprep.subr.mxu0 0.0
        %676 = vmatpush1.msra.mxu0 %v641
        %677 = vmatprep.subr.mxu0 0.0
        %678 = vmatpush1.msra.mxu0 %v642
        %679 = vmatprep.subr.mxu0 0.0
        %680 = vmatpush1.msra.mxu0 0.0
        %681 = vmatprep.subr.mxu0 0.0
        %682 = vmatpush1.msra.mxu0 0.0
        %683 = vmatprep.subr.mxu0 0.0
        %684 = vmatpush1.msra.mxu0 0.0
        %685 = vmatprep.subr.mxu0 0.0
        %686 = vmatpush1.msra.mxu0 0.0
        %687 = vmatprep.subr.mxu0 0.0
        %688 = vmatpush1.msra.mxu0 0.0
        %689 = vmatprep.subr.mxu0 0.0
        %690 = vmatpush1.msra.mxu0 0.0
        %691 = vmatprep.subr.mxu0 0.0
        %692 = vmatpush1.msra.mxu0 0.0
        %693 = vmatprep.subr.mxu0 0.0
        %694 = vmatpush1.msra.mxu0 0.0
        %695 = vmatprep.subr.mxu0 0.0
        %696 = vmatpush1.msra.mxu0 0.0
        %697 = vmatprep.subr.mxu0 0.0
        %698 = vmatpush1.msra.mxu0 0.0
        %699 = vmatprep.subr.mxu0 0.0
        %700 = vmatpush1.msra.mxu0 0.0
        %701 = vmatprep.subr.mxu0 0.0
        %702 = vmatpush1.msra.mxu0 0.0
        %703 = vmatprep.subr.mxu0 0.0
        %704 = vmatpush1.msra.mxu0 0.0
        %705 = vmatprep.subr.mxu0 0.0
        %706 = vmatpush1.msra.mxu0 0.0
        %707 = vmatprep.mubr.f32.mxu0 %v545
        %708 = vmatmul.mubr.f32.gmra.mrb[0].mxu0 %v521
        %v709 = vpop.f32.mrb[0].mxu0
        %v710 = vadd.f32 0.0, %v709
        %v711 = vpop.f32.mrb[0].mxu0
        %712 = vmatprep.mubr.f32.mxu0 %v548
        %713 = vmatmul.mubr.f32.gmra.mrb[0].mxu0 %v523
        %v714 = vpop.f32.mrb[0].mxu0
        %v715 = vadd.f32 0.0, %v714
        %v716 = vpop.f32.mrb[0].mxu0
        %717 = vdwg.mxu0
        %v718 = vmax.f32 %v617, %v710
        %v719 = vmax.f32 %v622, %v715
        %v720 = vld [vmem:[%s353] sm:$0xff]
        %v721 = vld [vmem:[%s353 + $0x8] sm:$0xff]
        %v722 = vld [vmem:[%s353 + $0x10] sm:$0xff]
        %v723 = vld [vmem:[%s353 + $0x18] sm:$0xff]
        %v724 = vld [vmem:[%s353 + $0x20] sm:$0xff]
        %v725 = vld [vmem:[%s353 + $0x28] sm:$0xff]
        %v726 = vld [vmem:[%s353 + $0x30] sm:$0xff]
        %v727 = vld [vmem:[%s353 + $0x38] sm:$0xff]
        %v728 = vld [vmem:[%s353 + $0x40] sm:$0xff]
        %v729 = vld [vmem:[%s353 + $0x48] sm:$0xff]
        %v730 = vld [vmem:[%s353 + $0x50] sm:$0xff]
        %v731 = vld [vmem:[%s353 + $0x58] sm:$0xff]
        %v732 = vld [vmem:[%s353 + $0x60] sm:$0xff]
        %v733 = vld [vmem:[%s353 + $0x68] sm:$0xff]
        %v734 = vld [vmem:[%s353 + $0x70] sm:$0xff]
        %v735 = vld [vmem:[%s353 + $0x78] sm:$0xff]
        %v736 = vld [vmem:[%s353 + $0x80] sm:$0xff]
        %v737 = vld [vmem:[%s353 + $0x88] sm:$0xff]
        %738 = vmatprep.subr.mxu0 0.0
        %739 = vmatpush1.msra.mxu0 %v720
        %740 = vmatprep.subr.mxu0 0.0
        %741 = vmatpush1.msra.mxu0 %v721
        %742 = vmatprep.subr.mxu0 0.0
        %743 = vmatpush1.msra.mxu0 %v722
        %744 = vmatprep.subr.mxu0 0.0
        %745 = vmatpush1.msra.mxu0 %v723
        %746 = vmatprep.subr.mxu0 0.0
        %747 = vmatpush1.msra.mxu0 %v724
        %748 = vmatprep.subr.mxu0 0.0
        %749 = vmatpush1.msra.mxu0 %v725
        %750 = vmatprep.subr.mxu0 0.0
        %751 = vmatpush1.msra.mxu0 %v726
        %752 = vmatprep.subr.mxu0 0.0
        %753 = vmatpush1.msra.mxu0 %v727
        %754 = vmatprep.subr.mxu0 0.0
        %755 = vmatpush1.msra.mxu0 %v728
        %756 = vmatprep.subr.mxu0 0.0
        %757 = vmatpush1.msra.mxu0 %v729
        %758 = vmatprep.subr.mxu0 0.0
        %759 = vmatpush1.msra.mxu0 %v730
        %760 = vmatprep.subr.mxu0 0.0
        %761 = vmatpush1.msra.mxu0 %v731
        %762 = vmatprep.subr.mxu0 0.0
        %763 = vmatpush1.msra.mxu0 %v732
        %764 = vmatprep.subr.mxu0 0.0
        %765 = vmatpush1.msra.mxu0 %v733
        %766 = vmatprep.subr.mxu0 0.0
        %767 = vmatpush1.msra.mxu0 %v734
        %768 = vmatprep.subr.mxu0 0.0
        %769 = vmatpush1.msra.mxu0 %v735
        %770 = vmatprep.subr.mxu0 0.0
        %771 = vmatpush1.msra.mxu0 %v736
        %772 = vmatprep.subr.mxu0 0.0
        %773 = vmatpush1.msra.mxu0 %v737
        %774 = vmatprep.subr.mxu0 0.0
        %775 = vmatpush1.msra.mxu0 0.0
        %776 = vmatprep.subr.mxu0 0.0
        %777 = vmatpush1.msra.mxu0 0.0
        %778 = vmatprep.subr.mxu0 0.0
        %779 = vmatpush1.msra.mxu0 0.0
        %780 = vmatprep.subr.mxu0 0.0
        %781 = vmatpush1.msra.mxu0 0.0
        %782 = vmatprep.subr.mxu0 0.0
        %783 = vmatpush1.msra.mxu0 0.0
        %784 = vmatprep.subr.mxu0 0.0
        %785 = vmatpush1.msra.mxu0 0.0
        %786 = vmatprep.subr.mxu0 0.0
        %787 = vmatpush1.msra.mxu0 0.0
        %788 = vmatprep.subr.mxu0 0.0
        %789 = vmatpush1.msra.mxu0 0.0
        %790 = vmatprep.subr.mxu0 0.0
        %791 = vmatpush1.msra.mxu0 0.0
        %792 = vmatprep.subr.mxu0 0.0
        %793 = vmatpush1.msra.mxu0 0.0
        %794 = vmatprep.subr.mxu0 0.0
        %795 = vmatpush1.msra.mxu0 0.0
        %796 = vmatprep.subr.mxu0 0.0
        %797 = vmatpush1.msra.mxu0 0.0
        %798 = vmatprep.subr.mxu0 0.0
        %799 = vmatpush1.msra.mxu0 0.0
        %800 = vmatprep.subr.mxu0 0.0
        %801 = vmatpush1.msra.mxu0 0.0
        %802 = vmatprep.mubr.f32.mxu0 %v545
        %803 = vmatmul.mubr.f32.gmra.mrb[0].mxu0 %v521
        %v804 = vpop.f32.mrb[0].mxu0
        %v805 = vadd.f32 0.0, %v804
        %v806 = vpop.f32.mrb[0].mxu0
        %807 = vmatprep.mubr.f32.mxu0 %v548
        %808 = vmatmul.mubr.f32.gmra.mrb[0].mxu0 %v523
        %v809 = vpop.f32.mrb[0].mxu0
        %v810 = vadd.f32 0.0, %v809
        %v811 = vpop.f32.mrb[0].mxu0
        %812 = vdwg.mxu0
        %v813 = vmax.f32 %v718, %v805
        %v814 = vmax.f32 %v719, %v810
        %v815 = vld [vmem:[%s438] sm:$0xff]
        %v816 = vld [vmem:[%s438 + $0x8] sm:$0xff]
        %v817 = vld [vmem:[%s438 + $0x10] sm:$0xff]
        %v818 = vld [vmem:[%s438 + $0x18] sm:$0xff]
        %v819 = vld [vmem:[%s438 + $0x20] sm:$0xff]
        %v820 = vld [vmem:[%s438 + $0x28] sm:$0xff]
        %v821 = vld [vmem:[%s438 + $0x30] sm:$0xff]
        %v822 = vld [vmem:[%s438 + $0x38] sm:$0xff]
        %v823 = vld [vmem:[%s438 + $0x40] sm:$0xff]
        %v824 = vld [vmem:[%s438 + $0x48] sm:$0xff]
        %v825 = vld [vmem:[%s438 + $0x50] sm:$0xff]
        %v826 = vld [vmem:[%s438 + $0x58] sm:$0xff]
        %v827 = vld [vmem:[%s438 + $0x60] sm:$0xff]
        %v828 = vld [vmem:[%s438 + $0x68] sm:$0xff]
        %v829 = vld [vmem:[%s438 + $0x70] sm:$0xff]
        %v830 = vld [vmem:[%s438 + $0x78] sm:$0xff]
        %v831 = vld [vmem:[%s438 + $0x80] sm:$0xff]
        %v832 = vld [vmem:[%s438 + $0x88] sm:$0xff]
        %833 = vmatprep.subr.mxu0 0.0
        %834 = vmatpush1.msra.mxu0 %v815
        %835 = vmatprep.subr.mxu0 0.0
        %836 = vmatpush1.msra.mxu0 %v816
        %837 = vmatprep.subr.mxu0 0.0
        %838 = vmatpush1.msra.mxu0 %v817
        %839 = vmatprep.subr.mxu0 0.0
        %840 = vmatpush1.msra.mxu0 %v818
        %841 = vmatprep.subr.mxu0 0.0
        %842 = vmatpush1.msra.mxu0 %v819
        %843 = vmatprep.subr.mxu0 0.0
        %844 = vmatpush1.msra.mxu0 %v820
        %845 = vmatprep.subr.mxu0 0.0
        %846 = vmatpush1.msra.mxu0 %v821
        %847 = vmatprep.subr.mxu0 0.0
        %848 = vmatpush1.msra.mxu0 %v822
        %849 = vmatprep.subr.mxu0 0.0
        %850 = vmatpush1.msra.mxu0 %v823
        %851 = vmatprep.subr.mxu0 0.0
        %852 = vmatpush1.msra.mxu0 %v824
        %853 = vmatprep.subr.mxu0 0.0
        %854 = vmatpush1.msra.mxu0 %v825
        %855 = vmatprep.subr.mxu0 0.0
        %856 = vmatpush1.msra.mxu0 %v826
        %857 = vmatprep.subr.mxu0 0.0
        %858 = vmatpush1.msra.mxu0 %v827
        %859 = vmatprep.subr.mxu0 0.0
        %860 = vmatpush1.msra.mxu0 %v828
        %861 = vmatprep.subr.mxu0 0.0
        %862 = vmatpush1.msra.mxu0 %v829
        %863 = vmatprep.subr.mxu0 0.0
        %864 = vmatpush1.msra.mxu0 %v830
        %865 = vmatprep.subr.mxu0 0.0
        %866 = vmatpush1.msra.mxu0 %v831
        %867 = vmatprep.subr.mxu0 0.0
        %868 = vmatpush1.msra.mxu0 %v832
        %869 = vmatprep.subr.mxu0 0.0
        %870 = vmatpush1.msra.mxu0 0.0
        %871 = vmatprep.subr.mxu0 0.0
        %872 = vmatpush1.msra.mxu0 0.0
        %873 = vmatprep.subr.mxu0 0.0
        %874 = vmatpush1.msra.mxu0 0.0
        %875 = vmatprep.subr.mxu0 0.0
        %876 = vmatpush1.msra.mxu0 0.0
        %877 = vmatprep.subr.mxu0 0.0
        %878 = vmatpush1.msra.mxu0 0.0
        %879 = vmatprep.subr.mxu0 0.0
        %880 = vmatpush1.msra.mxu0 0.0
        %881 = vmatprep.subr.mxu0 0.0
        %882 = vmatpush1.msra.mxu0 0.0
        %883 = vmatprep.subr.mxu0 0.0
        %884 = vmatpush1.msra.mxu0 0.0
        %885 = vmatprep.subr.mxu0 0.0
        %886 = vmatpush1.msra.mxu0 0.0
        %887 = vmatprep.subr.mxu0 0.0
        %888 = vmatpush1.msra.mxu0 0.0
        %889 = vmatprep.subr.mxu0 0.0
        %890 = vmatpush1.msra.mxu0 0.0
        %891 = vmatprep.subr.mxu0 0.0
        %892 = vmatpush1.msra.mxu0 0.0
        %893 = vmatprep.subr.mxu0 0.0
        %894 = vmatpush1.msra.mxu0 0.0
        %895 = vmatprep.subr.mxu0 0.0
        %896 = vmatpush1.msra.mxu0 0.0
        %897 = vmatprep.mubr.f32.mxu0 %v545
        %898 = vmatmul.mubr.f32.gmra.mrb[0].mxu0 %v521
        %v899 = vpop.f32.mrb[0].mxu0
        %v900 = vadd.f32 0.0, %v899
        %v901 = vpop.f32.mrb[0].mxu0
        %902 = vmatprep.mubr.f32.mxu0 %v548
        %903 = vmatmul.mubr.f32.gmra.mrb[0].mxu0 %v523
        %v904 = vpop.f32.mrb[0].mxu0
        %v905 = vadd.f32 0.0, %v904
        %v906 = vpop.f32.mrb[0].mxu0
        %907 = vdwg.mxu0
        %v908 = vmax.f32 %v813, %v900
        %v909 = vmax.f32 %v814, %v905
        %v910 = vld [vmem:[%s2] sm:$0xff]
        %v911 = vld [vmem:[%s2 + $0x8] sm:$0xff]
        %913 = vset.pattern.permute.xlu0 0
        %914 = vperm.xlu0 %913, %v910
        %v915 = vpop.permute.xlu0 %914
        %918 = vset.pattern.permute.xlu0 0
        %919 = vperm.xlu0 %918, %v911
        %v920 = vpop.permute.xlu0 %919
        %v922 = vadd.f32 %v908, %v915
        %v923 = vadd.f32 %v909, %v920
        %v924 = vmax.f32 %v922, 0.0
        %v925 = vmax.f32 %v923, 0.0
        %926 = vst.msk [vmem:[%s221] sm:$0xff] %vm224, %v924
        %927 = vst.msk [vmem:[%s221 + $0x8] sm:$0xff] %vm224, %v925
        %s928 = sand.u32 %s113, 1
        %s929 = scalar_lea.sflag [#allocation5], %s928
        %s930 = sand.u32 %s113, 1
        %s931 = smul.addr %s930, 16
        %s932 = scalar_lea.vmem [#allocation8], %s931
        // Predicated region
        $region41: #{tpu_custom_call.1} parent=31 // pred_check
          %p933 = pneg %p123
        $region42: #{tpu_custom_call.1} parent=31 // pred_check_branch
          %935 = sbr.rel (%p933) target = $region44
        $region43: #{tpu_custom_call.1} parent=31 // pred_region
          %s937 = ssub.s32 256, 256
          %938 = vsyncadd %s929, %s937
          %s939 = smul.addr %s26, 2
          %s940 = smul.addr %s25, 2
          %s941 = sadd.s32 %s939, %s940
          %s942 = smul.addr %s941, 128
          %s943 = scalar_lea.hbm %s3, %s942
          %s944 = sshll.u32 %s932, 4
          %s945 = int_to_ptr.vmem [resolvable:$true] %s944
          %950 = dma.vmem_to_hbm [thread:$0]  %s945, 256, %s943, %s929, 128, 128, 8
        $region44: #{tpu_custom_call.1} parent=31 // pred_fallthru
          _
      $region32: #{tpu_custom_call.1} parent=5 // pred_fallthru
        _
      %p951 = scmp.le.s32.totalorder 2, %s16
      // Predicated region
      $region45: #{tpu_custom_call.1} parent=5 // pred_check
        %p952 = pneg %p951
      $region46: #{tpu_custom_call.1} parent=5 // pred_check_branch
        %954 = sbr.rel (%p952) target = $region48
      $region47: #{tpu_custom_call.1} parent=5 // pred_region
        %s955 = ssub.s32 %s16, 2
        // Predicated region
        $region49: #{tpu_custom_call.1} parent=47 // pred_check
          %p956 = pneg %p129
        $region50: #{tpu_custom_call.1} parent=47 // pred_check_branch
          %958 = sbr.rel (%p956) target = $region52
        $region51: #{tpu_custom_call.1} parent=47 // pred_region
          %s959 = sand.u32 %s114, 1
          %s960 = scalar_lea.sflag [#allocation5], %s959
          %s961 = sand.u32 %s114, 1
          %s962 = smul.addr %s961, 16
          %s963 = scalar_lea.vmem [#allocation8], %s962
          %964 = dma.done %s960, 256
        $region52: #{tpu_custom_call.1} parent=47 // pred_fallthru
          _
      $region48: #{tpu_custom_call.1} parent=5 // pred_fallthru
        _
    $region6: #{tpu_custom_call.1} parent=1 // loop_footer
      %s20 = sadd.s32 1, %s16
    $region7: #{tpu_custom_call.1} parent=1 // loop_footer_branch
      %15 = sbr.rel target = $region3
    $region8: #{tpu_custom_call.1} parent=1 // loop_exit
      _
    %965 = vsyncpa [#allocation4], 1
    %s966 = scalar_lea.sflag [#allocation4], 1
    %967 = vsyncpa %s966, 1
    %968 = vsyncpa [#allocation7], 1
    %969 = vsyncpa [#allocation5], 1
    %s970 = scalar_lea.sflag [#allocation5], 1
    %971 = vsyncpa %s970, 1

</llo_original>
